<compile_context>
chip_gen: v5e
topology: v5e:2x2
jax: 0.10.0
libtpu: 0.0.40
codegen_flags: <defaults>
</compile_context>

<pallas_src>
import functools

import jax
import jax.numpy as jnp
import numpy as np
from jax.experimental import pallas as pl

LEAKY_SLOPE = 0.01   # F.leaky_relu default negative_slope
BN_EPS = 1e-5        # nn.BatchNorm2d default eps


# --------------------------------------------------------------------------
# In-kernel helpers (all operate on register values in the lane-folded
# (rows = N*H, lanes = W*C) layout).
# --------------------------------------------------------------------------
def _shift_rows(x3, ky):
    """x3: (N, H, L).  Per-image circular H shift:
    result[:, y, :] = x3[:, (y + ky) % H, :]  (works for ky in {-1, 0, 1})."""
    if ky == 0:
        return x3
    return jnp.concatenate([x3[:, ky:, :], x3[:, :ky, :]], axis=1)


def _shift_lanes(x2, s):
    """x2: (R, L).  Circular lane shift: result[:, l] = x2[:, (l + s) % L]."""
    if s == 0:
        return x2
    return jnp.concatenate([x2[:, s:], x2[:, :s]], axis=1)


def _conv3x3_wrap(x2d, wblk_ref, *, n, h, w, cin, cout):
    """Circular (wrap-padded) 3x3 conv in the lane-folded layout.

    x2d:      (N*H, W*cin) activation value (row = (n,h), lane = w*cin + c).
    wblk_ref: (9, W*cin, W*cout) VMEM ref of block-diagonal tap weights,
              tap order dh-major (index = (ky+1)*3 + (kx+1)).
    Returns (N*H, W*cout) f32.  No pad scratch, no strided-window reshapes:
    each tap is a cheap shift of resident data + one MXU dot.
    """
    l_in = w * cin
    x3 = x2d.reshape(n, h, l_in)
    acc = None
    tap_idx = 0
    for ky in (-1, 0, 1):
        rows = _shift_rows(x3, ky).reshape(n * h, l_in)
        for kx in (-1, 0, 1):
            tap = _shift_lanes(rows, kx * cin)
            contrib = jnp.dot(tap, wblk_ref[tap_idx],
                              preferred_element_type=jnp.float32)
            acc = contrib if acc is None else acc + contrib
            tap_idx += 1
    return acc


def _lane_allreduce_blocks(v, block):
    """v: (1, L) with L = W*block and W a power of two.  Returns (1, L) where
    every lane l holds sum_w v[:, w*block + (l % block)] -- i.e. the
    per-channel total, already broadcast back over the W blocks."""
    l = v.shape[1]
    step = l // 2
    while step >= block:
        v = v + _shift_lanes(v, step)
        step //= 2
    return v


def _bn_leaky(acc, gamma_t, beta_t, cout, inv_count):
    """Training-mode BatchNorm2d (batch stats over N*H*W, biased variance,
    eps=1e-5) followed by LeakyReLU(0.01), entirely in the lane-folded layout.

    acc: (N*H, W*C) conv output;  gamma_t/beta_t: (1, W*C) affine params
    pre-tiled over W;  inv_count = 1 / (N*H*W).
    """
    colsum = jnp.sum(acc, axis=0, keepdims=True)                   # (1, W*C)
    mean_t = _lane_allreduce_blocks(colsum, cout) * inv_count      # tiled mean
    centered = acc - mean_t                                        # two-pass var
    sq = jnp.sum(centered * centered, axis=0, keepdims=True)
    var_t = _lane_allreduce_blocks(sq, cout) * inv_count           # tiled var
    y = centered * (gamma_t * jax.lax.rsqrt(var_t + BN_EPS)) + beta_t
    return jnp.where(y >= 0.0, y, LEAKY_SLOPE * y)


# --------------------------------------------------------------------------
# Fused kernel: (wrap -> 3x3 conv -> BN -> LReLU) x2 -> 1x1 conv -> BN -> LReLU
# --------------------------------------------------------------------------
def _conv_block2d_kernel(x_ref, w1_ref, w2_ref, w3_ref, bn_ref, o_ref,
                         *, n, h, w, cin, cout):
    inv_count = 1.0 / float(n * h * w)

    # ---- stage 1 -----------------------------------------------------------
    acc = _conv3x3_wrap(x_ref[...], w1_ref, n=n, h=h, w=w, cin=cin, cout=cout)
    y = _bn_leaky(acc, bn_ref[0:1, :], bn_ref[1:2, :], cout, inv_count)

    # ---- stage 2 -----------------------------------------------------------
    acc = _conv3x3_wrap(y, w2_ref, n=n, h=h, w=w, cin=cout, cout=cout)
    y = _bn_leaky(acc, bn_ref[2:3, :], bn_ref[3:4, :], cout, inv_count)

    # ---- stage 3: 1x1 conv -------------------------------------------------
    acc = jnp.dot(y, w3_ref[...], preferred_element_type=jnp.float32)
    y = _bn_leaky(acc, bn_ref[4:5, :], bn_ref[5:6, :], cout, inv_count)

    o_ref[...] = y.astype(o_ref.dtype)          # lane-dense (N*H, W*Cout) store


# --------------------------------------------------------------------------
# Public wrapper (NCHW in / NCHW out, PyTorch-native parameters)
# --------------------------------------------------------------------------
def conv_block2d(x_nchw, params):
    n, cin, h, w = x_nchw.shape
    cout = params["w1"].shape[0]
    if w & (w - 1):
        raise NotImplementedError("W must be a power of two for the lane "
                                  "shift-add BN reduction (see TODO).")
    f32 = jnp.float32
    eye_w = jnp.eye(w, dtype=f32)

    # ---- wrapper-side layout plumbing (weights only, done once per call) ---
    # kron(I_W, tap) turns the per-tap (Cin, Cout) contraction into a single
    # lane-folded MXU dot (N*H, W*Cin) @ (W*Cin, W*Cout).
    def blk3x3(w_oihw):
        hwio = jnp.transpose(w_oihw.astype(f32), (2, 3, 1, 0))      # (3,3,I,O)
        return jnp.stack([jnp.kron(eye_w, hwio[dh, dw])
                          for dh in range(3) for dw in range(3)])   # (9,W*I,W*O)

    w1_blk = blk3x3(params["w1"])                                   # (9, W*Cin, W*Cout)
    w2_blk = blk3x3(params["w2"])                                   # (9, W*Cout, W*Cout)
    w3_io = params["w3"].astype(f32).reshape(cout, cout).T          # (Cin, Cout)
    w3_blk = jnp.kron(eye_w, w3_io)                                 # (W*Cout, W*Cout)

    # BN affine params pre-tiled over W and packed into one lane-dense array.
    def tile_w(v):
        return jnp.tile(v.astype(f32).reshape(1, cout), (1, w))     # (1, W*Cout)

    bn = jnp.concatenate([tile_w(params["g1"]), tile_w(params["be1"]),
                          tile_w(params["g2"]), tile_w(params["be2"]),
                          tile_w(params["g3"]), tile_w(params["be3"])],
                         axis=0)                                    # (6, W*Cout)

    # Lane-folded input: row = (n, h), lane = w*Cin + c.
    x2d = jnp.transpose(x_nchw, (0, 2, 3, 1)).astype(f32).reshape(n * h, w * cin)

    kernel = functools.partial(_conv_block2d_kernel,
                               n=n, h=h, w=w, cin=cin, cout=cout)
    out2d = pl.pallas_call(
        kernel,
        out_shape=jax.ShapeDtypeStruct((n * h, w * cout), f32),     # (32, 128)
    )(x2d, w1_blk, w2_blk, w3_blk, bn)

    return jnp.transpose(out2d.reshape(n, h, w, cout), (0, 3, 1, 2))


# --------------------------------------------------------------------------
# Pure-JAX reference (includes the conv biases the kernel legitimately drops)
# --------------------------------------------------------------------------
def _reference(x, p):
    def circ_pad(x):
        x = jnp.concatenate([x[:, :, -1:, :], x, x[:, :, :1, :]], axis=2)
        x = jnp.concatenate([x[:, :, :, -1:], x, x[:, :, :, :1]], axis=3)
        return x

    def conv(x, w, b):
        y = jax.lax.conv_general_dilated(
            x, w, (1, 1), "VALID", dimension_numbers=("NCHW", "OIHW", "NCHW"))
        return y + b.reshape(1, -1, 1, 1)

    def bn_lrelu(x, g, be):
        mean = jnp.mean(x, axis=(0, 2, 3), keepdims=True)
        var = jnp.mean((x - mean) ** 2, axis=(0, 2, 3), keepdims=True)
        y = (x - mean) / jnp.sqrt(var + BN_EPS) * g.reshape(1, -1, 1, 1) \
            + be.reshape(1, -1, 1, 1)
        return jnp.where(y >= 0, y, LEAKY_SLOPE * y)

    x = bn_lrelu(conv(circ_pad(x), p["w1"], p["b1"]), p["g1"], p["be1"])
    x = bn_lrelu(conv(circ_pad(x), p["w2"], p["b2"]), p["g2"], p["be2"])
    x = bn_lrelu(conv(x, p["w3"], p["b3"]), p["g3"], p["be3"])
    return x


# --------------------------------------------------------------------------
if __name__ == "__main__":
    N, Cin, H, W = 2, 4, 16, 16
    Cout = 8

    key = jax.random.PRNGKey(0)
    ks = jax.random.split(key, 16)

    params = {
        "w1": jax.random.normal(ks[0], (Cout, Cin, 3, 3), jnp.float32) * 0.2,
        "b1": jax.random.normal(ks[1], (Cout,), jnp.float32) * 0.1,
        "w2": jax.random.normal(ks[2], (Cout, Cout, 3, 3), jnp.float32) * 0.2,
        "b2": jax.random.normal(ks[3], (Cout,), jnp.float32) * 0.1,
        "w3": jax.random.normal(ks[4], (Cout, Cout, 1, 1), jnp.float32) * 0.2,
        "b3": jax.random.normal(ks[5], (Cout,), jnp.float32) * 0.1,
        "g1": 1.0 + 0.1 * jax.random.normal(ks[6], (Cout,), jnp.float32),
        "be1": 0.1 * jax.random.normal(ks[7], (Cout,), jnp.float32),
        "g2": 1.0 + 0.1 * jax.random.normal(ks[8], (Cout,), jnp.float32),
        "be2": 0.1 * jax.random.normal(ks[9], (Cout,), jnp.float32),
        "g3": 1.0 + 0.1 * jax.random.normal(ks[10], (Cout,), jnp.float32),
        "be3": 0.1 * jax.random.normal(ks[11], (Cout,), jnp.float32),
    }
    x = jax.random.normal(ks[12], (N, Cin, H, W), jnp.float32)

    out = jax.block_until_ready(jax.jit(conv_block2d)(x, params))
    assert out.shape == (N, Cout, H, W)

    ref = _reference(x, params)
    np.testing.assert_allclose(np.asarray(out), np.asarray(ref),
                               rtol=1e-3, atol=5e-4)

    print("KERNEL_OK")
</pallas_src>

<mosaic_0001>
module attributes {stable_mosaic.version = 11 : i64} {
  func.func @_conv_block2d_kernel(%arg0: memref<32x64xf32, #tpu.memory_space<vmem>>, %arg1: memref<9x64x128xf32, #tpu.memory_space<vmem>>, %arg2: memref<9x128x128xf32, #tpu.memory_space<vmem>>, %arg3: memref<128x128xf32, #tpu.memory_space<vmem>>, %arg4: memref<6x128xf32, #tpu.memory_space<vmem>>, %arg5: memref<32x128xf32, #tpu.memory_space<vmem>>) attributes {dimension_semantics = [], scalar_prefetch = 0 : i64, scratch_operands = 0 : i64, tpu.core_type = #tpu.core_type<tc>} {
    %c0 = arith.constant 0 : index
    %c0_0 = arith.constant 0 : index
    %0 = vector.load %arg0[%c0, %c0_0] : memref<32x64xf32, #tpu.memory_space<vmem>>, vector<32x64xf32>
    %1 = vector.shape_cast %0 : vector<32x64xf32> to vector<2x16x64xf32>
    %2 = vector.extract_strided_slice %1 {offsets = [0, 15, 0], sizes = [2, 1, 64], strides = [1, 1, 1]} : vector<2x16x64xf32> to vector<2x1x64xf32>
    %3 = vector.extract_strided_slice %1 {offsets = [0, 0, 0], sizes = [2, 15, 64], strides = [1, 1, 1]} : vector<2x16x64xf32> to vector<2x15x64xf32>
    %4 = tpu.concatenate %2, %3 in 1 : vector<2x1x64xf32>, vector<2x15x64xf32> -> vector<2x16x64xf32>
    %5 = vector.shape_cast %4 : vector<2x16x64xf32> to vector<32x64xf32>
    %6 = vector.extract_strided_slice %5 {offsets = [0, 60], sizes = [32, 4], strides = [1, 1]} : vector<32x64xf32> to vector<32x4xf32>
    %7 = vector.extract_strided_slice %5 {offsets = [0, 0], sizes = [32, 60], strides = [1, 1]} : vector<32x64xf32> to vector<32x60xf32>
    %8 = tpu.concatenate %6, %7 in 1 : vector<32x4xf32>, vector<32x60xf32> -> vector<32x64xf32>
    %c0_1 = arith.constant 0 : index
    %c0_2 = arith.constant 0 : index
    %c0_3 = arith.constant 0 : index
    %9 = vector.load %arg1[%c0_1, %c0_2, %c0_3] : memref<9x64x128xf32, #tpu.memory_space<vmem>>, vector<1x64x128xf32>
    %10 = vector.shape_cast %9 : vector<1x64x128xf32> to vector<64x128xf32>
    %cst = arith.constant dense<0.000000e+00> : vector<32x128xf32>
    %11 = tpu.matmul %8, %10, %cst {dimension_numbers = #tpu.dot_dimension_numbers<[1], [0], [0], [1], [0, 0, 1, 1], [], []>} : vector<32x64xf32>, vector<64x128xf32>, vector<32x128xf32> -> vector<32x128xf32>
    %c1 = arith.constant 1 : index
    %c0_4 = arith.constant 0 : index
    %c0_5 = arith.constant 0 : index
    %12 = vector.load %arg1[%c1, %c0_4, %c0_5] : memref<9x64x128xf32, #tpu.memory_space<vmem>>, vector<1x64x128xf32>
    %13 = vector.shape_cast %12 : vector<1x64x128xf32> to vector<64x128xf32>
    %cst_6 = arith.constant dense<0.000000e+00> : vector<32x128xf32>
    %14 = tpu.matmul %5, %13, %cst_6 {dimension_numbers = #tpu.dot_dimension_numbers<[1], [0], [0], [1], [0, 0, 1, 1], [], []>} : vector<32x64xf32>, vector<64x128xf32>, vector<32x128xf32> -> vector<32x128xf32>
    %15 = arith.addf %11, %14 : vector<32x128xf32>
    %16 = vector.extract_strided_slice %5 {offsets = [0, 4], sizes = [32, 60], strides = [1, 1]} : vector<32x64xf32> to vector<32x60xf32>
    %17 = vector.extract_strided_slice %5 {offsets = [0, 0], sizes = [32, 4], strides = [1, 1]} : vector<32x64xf32> to vector<32x4xf32>
    %18 = tpu.concatenate %16, %17 in 1 : vector<32x60xf32>, vector<32x4xf32> -> vector<32x64xf32>
    %c2 = arith.constant 2 : index
    %c0_7 = arith.constant 0 : index
    %c0_8 = arith.constant 0 : index
    %19 = vector.load %arg1[%c2, %c0_7, %c0_8] : memref<9x64x128xf32, #tpu.memory_space<vmem>>, vector<1x64x128xf32>
    %20 = vector.shape_cast %19 : vector<1x64x128xf32> to vector<64x128xf32>
    %cst_9 = arith.constant dense<0.000000e+00> : vector<32x128xf32>
    %21 = tpu.matmul %18, %20, %cst_9 {dimension_numbers = #tpu.dot_dimension_numbers<[1], [0], [0], [1], [0, 0, 1, 1], [], []>} : vector<32x64xf32>, vector<64x128xf32>, vector<32x128xf32> -> vector<32x128xf32>
    %22 = arith.addf %15, %21 : vector<32x128xf32>
    %23 = vector.shape_cast %1 : vector<2x16x64xf32> to vector<32x64xf32>
    %24 = vector.extract_strided_slice %23 {offsets = [0, 60], sizes = [32, 4], strides = [1, 1]} : vector<32x64xf32> to vector<32x4xf32>
    %25 = vector.extract_strided_slice %23 {offsets = [0, 0], sizes = [32, 60], strides = [1, 1]} : vector<32x64xf32> to vector<32x60xf32>
    %26 = tpu.concatenate %24, %25 in 1 : vector<32x4xf32>, vector<32x60xf32> -> vector<32x64xf32>
    %c3 = arith.constant 3 : index
    %c0_10 = arith.constant 0 : index
    %c0_11 = arith.constant 0 : index
    %27 = vector.load %arg1[%c3, %c0_10, %c0_11] : memref<9x64x128xf32, #tpu.memory_space<vmem>>, vector<1x64x128xf32>
    %28 = vector.shape_cast %27 : vector<1x64x128xf32> to vector<64x128xf32>
    %cst_12 = arith.constant dense<0.000000e+00> : vector<32x128xf32>
    %29 = tpu.matmul %26, %28, %cst_12 {dimension_numbers = #tpu.dot_dimension_numbers<[1], [0], [0], [1], [0, 0, 1, 1], [], []>} : vector<32x64xf32>, vector<64x128xf32>, vector<32x128xf32> -> vector<32x128xf32>
    %30 = arith.addf %22, %29 : vector<32x128xf32>
    %c4 = arith.constant 4 : index
    %c0_13 = arith.constant 0 : index
    %c0_14 = arith.constant 0 : index
    %31 = vector.load %arg1[%c4, %c0_13, %c0_14] : memref<9x64x128xf32, #tpu.memory_space<vmem>>, vector<1x64x128xf32>
    %32 = vector.shape_cast %31 : vector<1x64x128xf32> to vector<64x128xf32>
    %cst_15 = arith.constant dense<0.000000e+00> : vector<32x128xf32>
    %33 = tpu.matmul %23, %32, %cst_15 {dimension_numbers = #tpu.dot_dimension_numbers<[1], [0], [0], [1], [0, 0, 1, 1], [], []>} : vector<32x64xf32>, vector<64x128xf32>, vector<32x128xf32> -> vector<32x128xf32>
    %34 = arith.addf %30, %33 : vector<32x128xf32>
    %35 = vector.extract_strided_slice %23 {offsets = [0, 4], sizes = [32, 60], strides = [1, 1]} : vector<32x64xf32> to vector<32x60xf32>
    %36 = vector.extract_strided_slice %23 {offsets = [0, 0], sizes = [32, 4], strides = [1, 1]} : vector<32x64xf32> to vector<32x4xf32>
    %37 = tpu.concatenate %35, %36 in 1 : vector<32x60xf32>, vector<32x4xf32> -> vector<32x64xf32>
    %c5 = arith.constant 5 : index
    %c0_16 = arith.constant 0 : index
    %c0_17 = arith.constant 0 : index
    %38 = vector.load %arg1[%c5, %c0_16, %c0_17] : memref<9x64x128xf32, #tpu.memory_space<vmem>>, vector<1x64x128xf32>
    %39 = vector.shape_cast %38 : vector<1x64x128xf32> to vector<64x128xf32>
    %cst_18 = arith.constant dense<0.000000e+00> : vector<32x128xf32>
    %40 = tpu.matmul %37, %39, %cst_18 {dimension_numbers = #tpu.dot_dimension_numbers<[1], [0], [0], [1], [0, 0, 1, 1], [], []>} : vector<32x64xf32>, vector<64x128xf32>, vector<32x128xf32> -> vector<32x128xf32>
    %41 = arith.addf %34, %40 : vector<32x128xf32>
    %42 = vector.extract_strided_slice %1 {offsets = [0, 1, 0], sizes = [2, 15, 64], strides = [1, 1, 1]} : vector<2x16x64xf32> to vector<2x15x64xf32>
    %43 = vector.extract_strided_slice %1 {offsets = [0, 0, 0], sizes = [2, 1, 64], strides = [1, 1, 1]} : vector<2x16x64xf32> to vector<2x1x64xf32>
    %44 = tpu.concatenate %42, %43 in 1 : vector<2x15x64xf32>, vector<2x1x64xf32> -> vector<2x16x64xf32>
    %45 = vector.shape_cast %44 : vector<2x16x64xf32> to vector<32x64xf32>
    %46 = vector.extract_strided_slice %45 {offsets = [0, 60], sizes = [32, 4], strides = [1, 1]} : vector<32x64xf32> to vector<32x4xf32>
    %47 = vector.extract_strided_slice %45 {offsets = [0, 0], sizes = [32, 60], strides = [1, 1]} : vector<32x64xf32> to vector<32x60xf32>
    %48 = tpu.concatenate %46, %47 in 1 : vector<32x4xf32>, vector<32x60xf32> -> vector<32x64xf32>
    %c6 = arith.constant 6 : index
    %c0_19 = arith.constant 0 : index
    %c0_20 = arith.constant 0 : index
    %49 = vector.load %arg1[%c6, %c0_19, %c0_20] : memref<9x64x128xf32, #tpu.memory_space<vmem>>, vector<1x64x128xf32>
    %50 = vector.shape_cast %49 : vector<1x64x128xf32> to vector<64x128xf32>
    %cst_21 = arith.constant dense<0.000000e+00> : vector<32x128xf32>
    %51 = tpu.matmul %48, %50, %cst_21 {dimension_numbers = #tpu.dot_dimension_numbers<[1], [0], [0], [1], [0, 0, 1, 1], [], []>} : vector<32x64xf32>, vector<64x128xf32>, vector<32x128xf32> -> vector<32x128xf32>
    %52 = arith.addf %41, %51 : vector<32x128xf32>
    %c7 = arith.constant 7 : index
    %c0_22 = arith.constant 0 : index
    %c0_23 = arith.constant 0 : index
    %53 = vector.load %arg1[%c7, %c0_22, %c0_23] : memref<9x64x128xf32, #tpu.memory_space<vmem>>, vector<1x64x128xf32>
    %54 = vector.shape_cast %53 : vector<1x64x128xf32> to vector<64x128xf32>
    %cst_24 = arith.constant dense<0.000000e+00> : vector<32x128xf32>
    %55 = tpu.matmul %45, %54, %cst_24 {dimension_numbers = #tpu.dot_dimension_numbers<[1], [0], [0], [1], [0, 0, 1, 1], [], []>} : vector<32x64xf32>, vector<64x128xf32>, vector<32x128xf32> -> vector<32x128xf32>
    %56 = arith.addf %52, %55 : vector<32x128xf32>
    %57 = vector.extract_strided_slice %45 {offsets = [0, 4], sizes = [32, 60], strides = [1, 1]} : vector<32x64xf32> to vector<32x60xf32>
    %58 = vector.extract_strided_slice %45 {offsets = [0, 0], sizes = [32, 4], strides = [1, 1]} : vector<32x64xf32> to vector<32x4xf32>
    %59 = tpu.concatenate %57, %58 in 1 : vector<32x60xf32>, vector<32x4xf32> -> vector<32x64xf32>
    %c8 = arith.constant 8 : index
    %c0_25 = arith.constant 0 : index
    %c0_26 = arith.constant 0 : index
    %60 = vector.load %arg1[%c8, %c0_25, %c0_26] : memref<9x64x128xf32, #tpu.memory_space<vmem>>, vector<1x64x128xf32>
    %61 = vector.shape_cast %60 : vector<1x64x128xf32> to vector<64x128xf32>
    %cst_27 = arith.constant dense<0.000000e+00> : vector<32x128xf32>
    %62 = tpu.matmul %59, %61, %cst_27 {dimension_numbers = #tpu.dot_dimension_numbers<[1], [0], [0], [1], [0, 0, 1, 1], [], []>} : vector<32x64xf32>, vector<64x128xf32>, vector<32x128xf32> -> vector<32x128xf32>
    %63 = arith.addf %56, %62 : vector<32x128xf32>
    %c0_28 = arith.constant 0 : index
    %c0_29 = arith.constant 0 : index
    %64 = vector.load %arg4[%c0_28, %c0_29] : memref<6x128xf32, #tpu.memory_space<vmem>>, vector<1x128xf32>
    %c1_30 = arith.constant 1 : index
    %c0_31 = arith.constant 0 : index
    %65 = vector.load %arg4[%c1_30, %c0_31] : memref<6x128xf32, #tpu.memory_space<vmem>>, vector<1x128xf32>
    %cst_32 = arith.constant dense<0.000000e+00> : vector<128xf32>
    %66 = vector.multi_reduction <add>, %63, %cst_32 [0] : vector<32x128xf32> to vector<128xf32>
    %67 = vector.shape_cast %66 : vector<128xf32> to vector<1x128xf32>
    %68 = vector.extract_strided_slice %67 {offsets = [0, 64], sizes = [1, 64], strides = [1, 1]} : vector<1x128xf32> to vector<1x64xf32>
    %69 = vector.extract_strided_slice %67 {offsets = [0, 0], sizes = [1, 64], strides = [1, 1]} : vector<1x128xf32> to vector<1x64xf32>
    %70 = tpu.concatenate %68, %69 in 1 : vector<1x64xf32>, vector<1x64xf32> -> vector<1x128xf32>
    %71 = arith.addf %67, %70 : vector<1x128xf32>
    %72 = vector.extract_strided_slice %71 {offsets = [0, 32], sizes = [1, 96], strides = [1, 1]} : vector<1x128xf32> to vector<1x96xf32>
    %73 = vector.extract_strided_slice %71 {offsets = [0, 0], sizes = [1, 32], strides = [1, 1]} : vector<1x128xf32> to vector<1x32xf32>
    %74 = tpu.concatenate %72, %73 in 1 : vector<1x96xf32>, vector<1x32xf32> -> vector<1x128xf32>
    %75 = arith.addf %71, %74 : vector<1x128xf32>
    %76 = vector.extract_strided_slice %75 {offsets = [0, 16], sizes = [1, 112], strides = [1, 1]} : vector<1x128xf32> to vector<1x112xf32>
    %77 = vector.extract_strided_slice %75 {offsets = [0, 0], sizes = [1, 16], strides = [1, 1]} : vector<1x128xf32> to vector<1x16xf32>
    %78 = tpu.concatenate %76, %77 in 1 : vector<1x112xf32>, vector<1x16xf32> -> vector<1x128xf32>
    %79 = arith.addf %75, %78 : vector<1x128xf32>
    %80 = vector.extract_strided_slice %79 {offsets = [0, 8], sizes = [1, 120], strides = [1, 1]} : vector<1x128xf32> to vector<1x120xf32>
    %81 = vector.extract_strided_slice %79 {offsets = [0, 0], sizes = [1, 8], strides = [1, 1]} : vector<1x128xf32> to vector<1x8xf32>
    %82 = tpu.concatenate %80, %81 in 1 : vector<1x120xf32>, vector<1x8xf32> -> vector<1x128xf32>
    %83 = arith.addf %79, %82 : vector<1x128xf32>
    %cst_33 = arith.constant 0.001953125 : f32
    %84 = vector.broadcast %cst_33 : f32 to vector<1x128xf32>
    %85 = arith.mulf %83, %84 : vector<1x128xf32>
    %86 = vector.broadcast %85 : vector<1x128xf32> to vector<32x128xf32>
    %87 = arith.subf %63, %86 : vector<32x128xf32>
    %88 = arith.mulf %87, %87 : vector<32x128xf32>
    %cst_34 = arith.constant dense<0.000000e+00> : vector<128xf32>
    %89 = vector.multi_reduction <add>, %88, %cst_34 [0] : vector<32x128xf32> to vector<128xf32>
    %90 = vector.shape_cast %89 : vector<128xf32> to vector<1x128xf32>
    %91 = vector.extract_strided_slice %90 {offsets = [0, 64], sizes = [1, 64], strides = [1, 1]} : vector<1x128xf32> to vector<1x64xf32>
    %92 = vector.extract_strided_slice %90 {offsets = [0, 0], sizes = [1, 64], strides = [1, 1]} : vector<1x128xf32> to vector<1x64xf32>
    %93 = tpu.concatenate %91, %92 in 1 : vector<1x64xf32>, vector<1x64xf32> -> vector<1x128xf32>
    %94 = arith.addf %90, %93 : vector<1x128xf32>
    %95 = vector.extract_strided_slice %94 {offsets = [0, 32], sizes = [1, 96], strides = [1, 1]} : vector<1x128xf32> to vector<1x96xf32>
    %96 = vector.extract_strided_slice %94 {offsets = [0, 0], sizes = [1, 32], strides = [1, 1]} : vector<1x128xf32> to vector<1x32xf32>
    %97 = tpu.concatenate %95, %96 in 1 : vector<1x96xf32>, vector<1x32xf32> -> vector<1x128xf32>
    %98 = arith.addf %94, %97 : vector<1x128xf32>
    %99 = vector.extract_strided_slice %98 {offsets = [0, 16], sizes = [1, 112], strides = [1, 1]} : vector<1x128xf32> to vector<1x112xf32>
    %100 = vector.extract_strided_slice %98 {offsets = [0, 0], sizes = [1, 16], strides = [1, 1]} : vector<1x128xf32> to vector<1x16xf32>
    %101 = tpu.concatenate %99, %100 in 1 : vector<1x112xf32>, vector<1x16xf32> -> vector<1x128xf32>
    %102 = arith.addf %98, %101 : vector<1x128xf32>
    %103 = vector.extract_strided_slice %102 {offsets = [0, 8], sizes = [1, 120], strides = [1, 1]} : vector<1x128xf32> to vector<1x120xf32>
    %104 = vector.extract_strided_slice %102 {offsets = [0, 0], sizes = [1, 8], strides = [1, 1]} : vector<1x128xf32> to vector<1x8xf32>
    %105 = tpu.concatenate %103, %104 in 1 : vector<1x120xf32>, vector<1x8xf32> -> vector<1x128xf32>
    %106 = arith.addf %102, %105 : vector<1x128xf32>
    %cst_35 = arith.constant 0.001953125 : f32
    %107 = vector.broadcast %cst_35 : f32 to vector<1x128xf32>
    %108 = arith.mulf %106, %107 : vector<1x128xf32>
    %cst_36 = arith.constant 9.99999974E-6 : f32
    %109 = vector.broadcast %cst_36 : f32 to vector<1x128xf32>
    %110 = arith.addf %108, %109 : vector<1x128xf32>
    %111 = math.rsqrt %110 : vector<1x128xf32>
    %112 = arith.mulf %64, %111 : vector<1x128xf32>
    %113 = vector.broadcast %112 : vector<1x128xf32> to vector<32x128xf32>
    %114 = arith.mulf %87, %113 : vector<32x128xf32>
    %115 = vector.broadcast %65 : vector<1x128xf32> to vector<32x128xf32>
    %116 = arith.addf %114, %115 : vector<32x128xf32>
    %cst_37 = arith.constant 0.000000e+00 : f32
    %117 = vector.broadcast %cst_37 : f32 to vector<32x128xf32>
    %118 = arith.cmpf oge, %116, %117 : vector<32x128xf32>
    %cst_38 = arith.constant 0.00999999977 : f32
    %119 = vector.broadcast %cst_38 : f32 to vector<32x128xf32>
    %120 = arith.mulf %119, %116 : vector<32x128xf32>
    %121 = arith.select %118, %116, %120 : vector<32x128xi1>, vector<32x128xf32>
    %122 = vector.shape_cast %121 : vector<32x128xf32> to vector<2x16x128xf32>
    %123 = vector.extract_strided_slice %122 {offsets = [0, 15, 0], sizes = [2, 1, 128], strides = [1, 1, 1]} : vector<2x16x128xf32> to vector<2x1x128xf32>
    %124 = vector.extract_strided_slice %122 {offsets = [0, 0, 0], sizes = [2, 15, 128], strides = [1, 1, 1]} : vector<2x16x128xf32> to vector<2x15x128xf32>
    %125 = tpu.concatenate %123, %124 in 1 : vector<2x1x128xf32>, vector<2x15x128xf32> -> vector<2x16x128xf32>
    %126 = vector.shape_cast %125 : vector<2x16x128xf32> to vector<32x128xf32>
    %127 = vector.extract_strided_slice %126 {offsets = [0, 120], sizes = [32, 8], strides = [1, 1]} : vector<32x128xf32> to vector<32x8xf32>
    %128 = vector.extract_strided_slice %126 {offsets = [0, 0], sizes = [32, 120], strides = [1, 1]} : vector<32x128xf32> to vector<32x120xf32>
    %129 = tpu.concatenate %127, %128 in 1 : vector<32x8xf32>, vector<32x120xf32> -> vector<32x128xf32>
    %c0_39 = arith.constant 0 : index
    %c0_40 = arith.constant 0 : index
    %c0_41 = arith.constant 0 : index
    %130 = vector.load %arg2[%c0_39, %c0_40, %c0_41] : memref<9x128x128xf32, #tpu.memory_space<vmem>>, vector<1x128x128xf32>
    %131 = vector.shape_cast %130 : vector<1x128x128xf32> to vector<128x128xf32>
    %cst_42 = arith.constant dense<0.000000e+00> : vector<32x128xf32>
    %132 = tpu.matmul %129, %131, %cst_42 {dimension_numbers = #tpu.dot_dimension_numbers<[1], [0], [0], [1], [0, 0, 1, 1], [], []>} : vector<32x128xf32>, vector<128x128xf32>, vector<32x128xf32> -> vector<32x128xf32>
    %c1_43 = arith.constant 1 : index
    %c0_44 = arith.constant 0 : index
    %c0_45 = arith.constant 0 : index
    %133 = vector.load %arg2[%c1_43, %c0_44, %c0_45] : memref<9x128x128xf32, #tpu.memory_space<vmem>>, vector<1x128x128xf32>
    %134 = vector.shape_cast %133 : vector<1x128x128xf32> to vector<128x128xf32>
    %cst_46 = arith.constant dense<0.000000e+00> : vector<32x128xf32>
    %135 = tpu.matmul %126, %134, %cst_46 {dimension_numbers = #tpu.dot_dimension_numbers<[1], [0], [0], [1], [0, 0, 1, 1], [], []>} : vector<32x128xf32>, vector<128x128xf32>, vector<32x128xf32> -> vector<32x128xf32>
    %136 = arith.addf %132, %135 : vector<32x128xf32>
    %137 = vector.extract_strided_slice %126 {offsets = [0, 8], sizes = [32, 120], strides = [1, 1]} : vector<32x128xf32> to vector<32x120xf32>
    %138 = vector.extract_strided_slice %126 {offsets = [0, 0], sizes = [32, 8], strides = [1, 1]} : vector<32x128xf32> to vector<32x8xf32>
    %139 = tpu.concatenate %137, %138 in 1 : vector<32x120xf32>, vector<32x8xf32> -> vector<32x128xf32>
    %c2_47 = arith.constant 2 : index
    %c0_48 = arith.constant 0 : index
    %c0_49 = arith.constant 0 : index
    %140 = vector.load %arg2[%c2_47, %c0_48, %c0_49] : memref<9x128x128xf32, #tpu.memory_space<vmem>>, vector<1x128x128xf32>
    %141 = vector.shape_cast %140 : vector<1x128x128xf32> to vector<128x128xf32>
    %cst_50 = arith.constant dense<0.000000e+00> : vector<32x128xf32>
    %142 = tpu.matmul %139, %141, %cst_50 {dimension_numbers = #tpu.dot_dimension_numbers<[1], [0], [0], [1], [0, 0, 1, 1], [], []>} : vector<32x128xf32>, vector<128x128xf32>, vector<32x128xf32> -> vector<32x128xf32>
    %143 = arith.addf %136, %142 : vector<32x128xf32>
    %144 = vector.shape_cast %122 : vector<2x16x128xf32> to vector<32x128xf32>
    %145 = vector.extract_strided_slice %144 {offsets = [0, 120], sizes = [32, 8], strides = [1, 1]} : vector<32x128xf32> to vector<32x8xf32>
    %146 = vector.extract_strided_slice %144 {offsets = [0, 0], sizes = [32, 120], strides = [1, 1]} : vector<32x128xf32> to vector<32x120xf32>
    %147 = tpu.concatenate %145, %146 in 1 : vector<32x8xf32>, vector<32x120xf32> -> vector<32x128xf32>
    %c3_51 = arith.constant 3 : index
    %c0_52 = arith.constant 0 : index
    %c0_53 = arith.constant 0 : index
    %148 = vector.load %arg2[%c3_51, %c0_52, %c0_53] : memref<9x128x128xf32, #tpu.memory_space<vmem>>, vector<1x128x128xf32>
    %149 = vector.shape_cast %148 : vector<1x128x128xf32> to vector<128x128xf32>
    %cst_54 = arith.constant dense<0.000000e+00> : vector<32x128xf32>
    %150 = tpu.matmul %147, %149, %cst_54 {dimension_numbers = #tpu.dot_dimension_numbers<[1], [0], [0], [1], [0, 0, 1, 1], [], []>} : vector<32x128xf32>, vector<128x128xf32>, vector<32x128xf32> -> vector<32x128xf32>
    %151 = arith.addf %143, %150 : vector<32x128xf32>
    %c4_55 = arith.constant 4 : index
    %c0_56 = arith.constant 0 : index
    %c0_57 = arith.constant 0 : index
    %152 = vector.load %arg2[%c4_55, %c0_56, %c0_57] : memref<9x128x128xf32, #tpu.memory_space<vmem>>, vector<1x128x128xf32>
    %153 = vector.shape_cast %152 : vector<1x128x128xf32> to vector<128x128xf32>
    %cst_58 = arith.constant dense<0.000000e+00> : vector<32x128xf32>
    %154 = tpu.matmul %144, %153, %cst_58 {dimension_numbers = #tpu.dot_dimension_numbers<[1], [0], [0], [1], [0, 0, 1, 1], [], []>} : vector<32x128xf32>, vector<128x128xf32>, vector<32x128xf32> -> vector<32x128xf32>
    %155 = arith.addf %151, %154 : vector<32x128xf32>
    %156 = vector.extract_strided_slice %144 {offsets = [0, 8], sizes = [32, 120], strides = [1, 1]} : vector<32x128xf32> to vector<32x120xf32>
    %157 = vector.extract_strided_slice %144 {offsets = [0, 0], sizes = [32, 8], strides = [1, 1]} : vector<32x128xf32> to vector<32x8xf32>
    %158 = tpu.concatenate %156, %157 in 1 : vector<32x120xf32>, vector<32x8xf32> -> vector<32x128xf32>
    %c5_59 = arith.constant 5 : index
    %c0_60 = arith.constant 0 : index
    %c0_61 = arith.constant 0 : index
    %159 = vector.load %arg2[%c5_59, %c0_60, %c0_61] : memref<9x128x128xf32, #tpu.memory_space<vmem>>, vector<1x128x128xf32>
    %160 = vector.shape_cast %159 : vector<1x128x128xf32> to vector<128x128xf32>
    %cst_62 = arith.constant dense<0.000000e+00> : vector<32x128xf32>
    %161 = tpu.matmul %158, %160, %cst_62 {dimension_numbers = #tpu.dot_dimension_numbers<[1], [0], [0], [1], [0, 0, 1, 1], [], []>} : vector<32x128xf32>, vector<128x128xf32>, vector<32x128xf32> -> vector<32x128xf32>
    %162 = arith.addf %155, %161 : vector<32x128xf32>
    %163 = vector.extract_strided_slice %122 {offsets = [0, 1, 0], sizes = [2, 15, 128], strides = [1, 1, 1]} : vector<2x16x128xf32> to vector<2x15x128xf32>
    %164 = vector.extract_strided_slice %122 {offsets = [0, 0, 0], sizes = [2, 1, 128], strides = [1, 1, 1]} : vector<2x16x128xf32> to vector<2x1x128xf32>
    %165 = tpu.concatenate %163, %164 in 1 : vector<2x15x128xf32>, vector<2x1x128xf32> -> vector<2x16x128xf32>
    %166 = vector.shape_cast %165 : vector<2x16x128xf32> to vector<32x128xf32>
    %167 = vector.extract_strided_slice %166 {offsets = [0, 120], sizes = [32, 8], strides = [1, 1]} : vector<32x128xf32> to vector<32x8xf32>
    %168 = vector.extract_strided_slice %166 {offsets = [0, 0], sizes = [32, 120], strides = [1, 1]} : vector<32x128xf32> to vector<32x120xf32>
    %169 = tpu.concatenate %167, %168 in 1 : vector<32x8xf32>, vector<32x120xf32> -> vector<32x128xf32>
    %c6_63 = arith.constant 6 : index
    %c0_64 = arith.constant 0 : index
    %c0_65 = arith.constant 0 : index
    %170 = vector.load %arg2[%c6_63, %c0_64, %c0_65] : memref<9x128x128xf32, #tpu.memory_space<vmem>>, vector<1x128x128xf32>
    %171 = vector.shape_cast %170 : vector<1x128x128xf32> to vector<128x128xf32>
    %cst_66 = arith.constant dense<0.000000e+00> : vector<32x128xf32>
    %172 = tpu.matmul %169, %171, %cst_66 {dimension_numbers = #tpu.dot_dimension_numbers<[1], [0], [0], [1], [0, 0, 1, 1], [], []>} : vector<32x128xf32>, vector<128x128xf32>, vector<32x128xf32> -> vector<32x128xf32>
    %173 = arith.addf %162, %172 : vector<32x128xf32>
    %c7_67 = arith.constant 7 : index
    %c0_68 = arith.constant 0 : index
    %c0_69 = arith.constant 0 : index
    %174 = vector.load %arg2[%c7_67, %c0_68, %c0_69] : memref<9x128x128xf32, #tpu.memory_space<vmem>>, vector<1x128x128xf32>
    %175 = vector.shape_cast %174 : vector<1x128x128xf32> to vector<128x128xf32>
    %cst_70 = arith.constant dense<0.000000e+00> : vector<32x128xf32>
    %176 = tpu.matmul %166, %175, %cst_70 {dimension_numbers = #tpu.dot_dimension_numbers<[1], [0], [0], [1], [0, 0, 1, 1], [], []>} : vector<32x128xf32>, vector<128x128xf32>, vector<32x128xf32> -> vector<32x128xf32>
    %177 = arith.addf %173, %176 : vector<32x128xf32>
    %178 = vector.extract_strided_slice %166 {offsets = [0, 8], sizes = [32, 120], strides = [1, 1]} : vector<32x128xf32> to vector<32x120xf32>
    %179 = vector.extract_strided_slice %166 {offsets = [0, 0], sizes = [32, 8], strides = [1, 1]} : vector<32x128xf32> to vector<32x8xf32>
    %180 = tpu.concatenate %178, %179 in 1 : vector<32x120xf32>, vector<32x8xf32> -> vector<32x128xf32>
    %c8_71 = arith.constant 8 : index
    %c0_72 = arith.constant 0 : index
    %c0_73 = arith.constant 0 : index
    %181 = vector.load %arg2[%c8_71, %c0_72, %c0_73] : memref<9x128x128xf32, #tpu.memory_space<vmem>>, vector<1x128x128xf32>
    %182 = vector.shape_cast %181 : vector<1x128x128xf32> to vector<128x128xf32>
    %cst_74 = arith.constant dense<0.000000e+00> : vector<32x128xf32>
    %183 = tpu.matmul %180, %182, %cst_74 {dimension_numbers = #tpu.dot_dimension_numbers<[1], [0], [0], [1], [0, 0, 1, 1], [], []>} : vector<32x128xf32>, vector<128x128xf32>, vector<32x128xf32> -> vector<32x128xf32>
    %184 = arith.addf %177, %183 : vector<32x128xf32>
    %c2_75 = arith.constant 2 : index
    %c0_76 = arith.constant 0 : index
    %185 = vector.load %arg4[%c2_75, %c0_76] : memref<6x128xf32, #tpu.memory_space<vmem>>, vector<1x128xf32>
    %c3_77 = arith.constant 3 : index
    %c0_78 = arith.constant 0 : index
    %186 = vector.load %arg4[%c3_77, %c0_78] : memref<6x128xf32, #tpu.memory_space<vmem>>, vector<1x128xf32>
    %cst_79 = arith.constant dense<0.000000e+00> : vector<128xf32>
    %187 = vector.multi_reduction <add>, %184, %cst_79 [0] : vector<32x128xf32> to vector<128xf32>
    %188 = vector.shape_cast %187 : vector<128xf32> to vector<1x128xf32>
    %189 = vector.extract_strided_slice %188 {offsets = [0, 64], sizes = [1, 64], strides = [1, 1]} : vector<1x128xf32> to vector<1x64xf32>
    %190 = vector.extract_strided_slice %188 {offsets = [0, 0], sizes = [1, 64], strides = [1, 1]} : vector<1x128xf32> to vector<1x64xf32>
    %191 = tpu.concatenate %189, %190 in 1 : vector<1x64xf32>, vector<1x64xf32> -> vector<1x128xf32>
    %192 = arith.addf %188, %191 : vector<1x128xf32>
    %193 = vector.extract_strided_slice %192 {offsets = [0, 32], sizes = [1, 96], strides = [1, 1]} : vector<1x128xf32> to vector<1x96xf32>
    %194 = vector.extract_strided_slice %192 {offsets = [0, 0], sizes = [1, 32], strides = [1, 1]} : vector<1x128xf32> to vector<1x32xf32>
    %195 = tpu.concatenate %193, %194 in 1 : vector<1x96xf32>, vector<1x32xf32> -> vector<1x128xf32>
    %196 = arith.addf %192, %195 : vector<1x128xf32>
    %197 = vector.extract_strided_slice %196 {offsets = [0, 16], sizes = [1, 112], strides = [1, 1]} : vector<1x128xf32> to vector<1x112xf32>
    %198 = vector.extract_strided_slice %196 {offsets = [0, 0], sizes = [1, 16], strides = [1, 1]} : vector<1x128xf32> to vector<1x16xf32>
    %199 = tpu.concatenate %197, %198 in 1 : vector<1x112xf32>, vector<1x16xf32> -> vector<1x128xf32>
    %200 = arith.addf %196, %199 : vector<1x128xf32>
    %201 = vector.extract_strided_slice %200 {offsets = [0, 8], sizes = [1, 120], strides = [1, 1]} : vector<1x128xf32> to vector<1x120xf32>
    %202 = vector.extract_strided_slice %200 {offsets = [0, 0], sizes = [1, 8], strides = [1, 1]} : vector<1x128xf32> to vector<1x8xf32>
    %203 = tpu.concatenate %201, %202 in 1 : vector<1x120xf32>, vector<1x8xf32> -> vector<1x128xf32>
    %204 = arith.addf %200, %203 : vector<1x128xf32>
    %cst_80 = arith.constant 0.001953125 : f32
    %205 = vector.broadcast %cst_80 : f32 to vector<1x128xf32>
    %206 = arith.mulf %204, %205 : vector<1x128xf32>
    %207 = vector.broadcast %206 : vector<1x128xf32> to vector<32x128xf32>
    %208 = arith.subf %184, %207 : vector<32x128xf32>
    %209 = arith.mulf %208, %208 : vector<32x128xf32>
    %cst_81 = arith.constant dense<0.000000e+00> : vector<128xf32>
    %210 = vector.multi_reduction <add>, %209, %cst_81 [0] : vector<32x128xf32> to vector<128xf32>
    %211 = vector.shape_cast %210 : vector<128xf32> to vector<1x128xf32>
    %212 = vector.extract_strided_slice %211 {offsets = [0, 64], sizes = [1, 64], strides = [1, 1]} : vector<1x128xf32> to vector<1x64xf32>
    %213 = vector.extract_strided_slice %211 {offsets = [0, 0], sizes = [1, 64], strides = [1, 1]} : vector<1x128xf32> to vector<1x64xf32>
    %214 = tpu.concatenate %212, %213 in 1 : vector<1x64xf32>, vector<1x64xf32> -> vector<1x128xf32>
    %215 = arith.addf %211, %214 : vector<1x128xf32>
    %216 = vector.extract_strided_slice %215 {offsets = [0, 32], sizes = [1, 96], strides = [1, 1]} : vector<1x128xf32> to vector<1x96xf32>
    %217 = vector.extract_strided_slice %215 {offsets = [0, 0], sizes = [1, 32], strides = [1, 1]} : vector<1x128xf32> to vector<1x32xf32>
    %218 = tpu.concatenate %216, %217 in 1 : vector<1x96xf32>, vector<1x32xf32> -> vector<1x128xf32>
    %219 = arith.addf %215, %218 : vector<1x128xf32>
    %220 = vector.extract_strided_slice %219 {offsets = [0, 16], sizes = [1, 112], strides = [1, 1]} : vector<1x128xf32> to vector<1x112xf32>
    %221 = vector.extract_strided_slice %219 {offsets = [0, 0], sizes = [1, 16], strides = [1, 1]} : vector<1x128xf32> to vector<1x16xf32>
    %222 = tpu.concatenate %220, %221 in 1 : vector<1x112xf32>, vector<1x16xf32> -> vector<1x128xf32>
    %223 = arith.addf %219, %222 : vector<1x128xf32>
    %224 = vector.extract_strided_slice %223 {offsets = [0, 8], sizes = [1, 120], strides = [1, 1]} : vector<1x128xf32> to vector<1x120xf32>
    %225 = vector.extract_strided_slice %223 {offsets = [0, 0], sizes = [1, 8], strides = [1, 1]} : vector<1x128xf32> to vector<1x8xf32>
    %226 = tpu.concatenate %224, %225 in 1 : vector<1x120xf32>, vector<1x8xf32> -> vector<1x128xf32>
    %227 = arith.addf %223, %226 : vector<1x128xf32>
    %cst_82 = arith.constant 0.001953125 : f32
    %228 = vector.broadcast %cst_82 : f32 to vector<1x128xf32>
    %229 = arith.mulf %227, %228 : vector<1x128xf32>
    %cst_83 = arith.constant 9.99999974E-6 : f32
    %230 = vector.broadcast %cst_83 : f32 to vector<1x128xf32>
    %231 = arith.addf %229, %230 : vector<1x128xf32>
    %232 = math.rsqrt %231 : vector<1x128xf32>
    %233 = arith.mulf %185, %232 : vector<1x128xf32>
    %234 = vector.broadcast %233 : vector<1x128xf32> to vector<32x128xf32>
    %235 = arith.mulf %208, %234 : vector<32x128xf32>
    %236 = vector.broadcast %186 : vector<1x128xf32> to vector<32x128xf32>
    %237 = arith.addf %235, %236 : vector<32x128xf32>
    %cst_84 = arith.constant 0.000000e+00 : f32
    %238 = vector.broadcast %cst_84 : f32 to vector<32x128xf32>
    %239 = arith.cmpf oge, %237, %238 : vector<32x128xf32>
    %cst_85 = arith.constant 0.00999999977 : f32
    %240 = vector.broadcast %cst_85 : f32 to vector<32x128xf32>
    %241 = arith.mulf %240, %237 : vector<32x128xf32>
    %242 = arith.select %239, %237, %241 : vector<32x128xi1>, vector<32x128xf32>
    %c0_86 = arith.constant 0 : index
    %c0_87 = arith.constant 0 : index
    %243 = vector.load %arg3[%c0_86, %c0_87] : memref<128x128xf32, #tpu.memory_space<vmem>>, vector<128x128xf32>
    %cst_88 = arith.constant dense<0.000000e+00> : vector<32x128xf32>
    %244 = tpu.matmul %242, %243, %cst_88 {dimension_numbers = #tpu.dot_dimension_numbers<[1], [0], [0], [1], [0, 0, 1, 1], [], []>} : vector<32x128xf32>, vector<128x128xf32>, vector<32x128xf32> -> vector<32x128xf32>
    %c4_89 = arith.constant 4 : index
    %c0_90 = arith.constant 0 : index
    %245 = vector.load %arg4[%c4_89, %c0_90] : memref<6x128xf32, #tpu.memory_space<vmem>>, vector<1x128xf32>
    %c5_91 = arith.constant 5 : index
    %c0_92 = arith.constant 0 : index
    %246 = vector.load %arg4[%c5_91, %c0_92] : memref<6x128xf32, #tpu.memory_space<vmem>>, vector<1x128xf32>
    %cst_93 = arith.constant dense<0.000000e+00> : vector<128xf32>
    %247 = vector.multi_reduction <add>, %244, %cst_93 [0] : vector<32x128xf32> to vector<128xf32>
    %248 = vector.shape_cast %247 : vector<128xf32> to vector<1x128xf32>
    %249 = vector.extract_strided_slice %248 {offsets = [0, 64], sizes = [1, 64], strides = [1, 1]} : vector<1x128xf32> to vector<1x64xf32>
    %250 = vector.extract_strided_slice %248 {offsets = [0, 0], sizes = [1, 64], strides = [1, 1]} : vector<1x128xf32> to vector<1x64xf32>
    %251 = tpu.concatenate %249, %250 in 1 : vector<1x64xf32>, vector<1x64xf32> -> vector<1x128xf32>
    %252 = arith.addf %248, %251 : vector<1x128xf32>
    %253 = vector.extract_strided_slice %252 {offsets = [0, 32], sizes = [1, 96], strides = [1, 1]} : vector<1x128xf32> to vector<1x96xf32>
    %254 = vector.extract_strided_slice %252 {offsets = [0, 0], sizes = [1, 32], strides = [1, 1]} : vector<1x128xf32> to vector<1x32xf32>
    %255 = tpu.concatenate %253, %254 in 1 : vector<1x96xf32>, vector<1x32xf32> -> vector<1x128xf32>
    %256 = arith.addf %252, %255 : vector<1x128xf32>
    %257 = vector.extract_strided_slice %256 {offsets = [0, 16], sizes = [1, 112], strides = [1, 1]} : vector<1x128xf32> to vector<1x112xf32>
    %258 = vector.extract_strided_slice %256 {offsets = [0, 0], sizes = [1, 16], strides = [1, 1]} : vector<1x128xf32> to vector<1x16xf32>
    %259 = tpu.concatenate %257, %258 in 1 : vector<1x112xf32>, vector<1x16xf32> -> vector<1x128xf32>
    %260 = arith.addf %256, %259 : vector<1x128xf32>
    %261 = vector.extract_strided_slice %260 {offsets = [0, 8], sizes = [1, 120], strides = [1, 1]} : vector<1x128xf32> to vector<1x120xf32>
    %262 = vector.extract_strided_slice %260 {offsets = [0, 0], sizes = [1, 8], strides = [1, 1]} : vector<1x128xf32> to vector<1x8xf32>
    %263 = tpu.concatenate %261, %262 in 1 : vector<1x120xf32>, vector<1x8xf32> -> vector<1x128xf32>
    %264 = arith.addf %260, %263 : vector<1x128xf32>
    %cst_94 = arith.constant 0.001953125 : f32
    %265 = vector.broadcast %cst_94 : f32 to vector<1x128xf32>
    %266 = arith.mulf %264, %265 : vector<1x128xf32>
    %267 = vector.broadcast %266 : vector<1x128xf32> to vector<32x128xf32>
    %268 = arith.subf %244, %267 : vector<32x128xf32>
    %269 = arith.mulf %268, %268 : vector<32x128xf32>
    %cst_95 = arith.constant dense<0.000000e+00> : vector<128xf32>
    %270 = vector.multi_reduction <add>, %269, %cst_95 [0] : vector<32x128xf32> to vector<128xf32>
    %271 = vector.shape_cast %270 : vector<128xf32> to vector<1x128xf32>
    %272 = vector.extract_strided_slice %271 {offsets = [0, 64], sizes = [1, 64], strides = [1, 1]} : vector<1x128xf32> to vector<1x64xf32>
    %273 = vector.extract_strided_slice %271 {offsets = [0, 0], sizes = [1, 64], strides = [1, 1]} : vector<1x128xf32> to vector<1x64xf32>
    %274 = tpu.concatenate %272, %273 in 1 : vector<1x64xf32>, vector<1x64xf32> -> vector<1x128xf32>
    %275 = arith.addf %271, %274 : vector<1x128xf32>
    %276 = vector.extract_strided_slice %275 {offsets = [0, 32], sizes = [1, 96], strides = [1, 1]} : vector<1x128xf32> to vector<1x96xf32>
    %277 = vector.extract_strided_slice %275 {offsets = [0, 0], sizes = [1, 32], strides = [1, 1]} : vector<1x128xf32> to vector<1x32xf32>
    %278 = tpu.concatenate %276, %277 in 1 : vector<1x96xf32>, vector<1x32xf32> -> vector<1x128xf32>
    %279 = arith.addf %275, %278 : vector<1x128xf32>
    %280 = vector.extract_strided_slice %279 {offsets = [0, 16], sizes = [1, 112], strides = [1, 1]} : vector<1x128xf32> to vector<1x112xf32>
    %281 = vector.extract_strided_slice %279 {offsets = [0, 0], sizes = [1, 16], strides = [1, 1]} : vector<1x128xf32> to vector<1x16xf32>
    %282 = tpu.concatenate %280, %281 in 1 : vector<1x112xf32>, vector<1x16xf32> -> vector<1x128xf32>
    %283 = arith.addf %279, %282 : vector<1x128xf32>
    %284 = vector.extract_strided_slice %283 {offsets = [0, 8], sizes = [1, 120], strides = [1, 1]} : vector<1x128xf32> to vector<1x120xf32>
    %285 = vector.extract_strided_slice %283 {offsets = [0, 0], sizes = [1, 8], strides = [1, 1]} : vector<1x128xf32> to vector<1x8xf32>
    %286 = tpu.concatenate %284, %285 in 1 : vector<1x120xf32>, vector<1x8xf32> -> vector<1x128xf32>
    %287 = arith.addf %283, %286 : vector<1x128xf32>
    %cst_96 = arith.constant 0.001953125 : f32
    %288 = vector.broadcast %cst_96 : f32 to vector<1x128xf32>
    %289 = arith.mulf %287, %288 : vector<1x128xf32>
    %cst_97 = arith.constant 9.99999974E-6 : f32
    %290 = vector.broadcast %cst_97 : f32 to vector<1x128xf32>
    %291 = arith.addf %289, %290 : vector<1x128xf32>
    %292 = math.rsqrt %291 : vector<1x128xf32>
    %293 = arith.mulf %245, %292 : vector<1x128xf32>
    %294 = vector.broadcast %293 : vector<1x128xf32> to vector<32x128xf32>
    %295 = arith.mulf %268, %294 : vector<32x128xf32>
    %296 = vector.broadcast %246 : vector<1x128xf32> to vector<32x128xf32>
    %297 = arith.addf %295, %296 : vector<32x128xf32>
    %cst_98 = arith.constant 0.000000e+00 : f32
    %298 = vector.broadcast %cst_98 : f32 to vector<32x128xf32>
    %299 = arith.cmpf oge, %297, %298 : vector<32x128xf32>
    %cst_99 = arith.constant 0.00999999977 : f32
    %300 = vector.broadcast %cst_99 : f32 to vector<32x128xf32>
    %301 = arith.mulf %300, %297 : vector<32x128xf32>
    %302 = arith.select %299, %297, %301 : vector<32x128xi1>, vector<32x128xf32>
    %c0_100 = arith.constant 0 : index
    %c0_101 = arith.constant 0 : index
    %303 = vector.load %arg5[%c0_100, %c0_101] : memref<32x128xf32, #tpu.memory_space<vmem>>, vector<32x128xf32>
    tpu.vector_store %arg5[%c0_100, %c0_101], %302 {strides = array<i32>} : memref<32x128xf32, #tpu.memory_space<vmem>>, vector<32x128xf32>,
    return
  }
}

</mosaic_0001>

<llo_original>
// kernel: conv_block2d.1
$region0: #{conv_block2d.1}
  #allocation0 [shape = 'u32[]', space=smem, size = 0x4, offset = 0x4, fixed_abs, tag = 'smem constant byte address 0x4 - core index']
  #allocation1 [shape = 'u32[72,128]{1,0:T(1,128)}', space=vmem, size = 0x9000, scoped, tag = 'internal scratch']
  %s0 = inlined_call_operand.vmem [shape: f32[32,64], index: 0, kind: input, shape index: {}]
  %s1 = inlined_call_operand.vmem [shape: f32[9,64,128], index: 1, kind: input, shape index: {}]
  %s2 = inlined_call_operand.vmem [shape: f32[9,128,128], index: 2, kind: input, shape index: {}]
  %s3 = inlined_call_operand.vmem [shape: f32[128,128], index: 3, kind: input, shape index: {}]
  %s4 = inlined_call_operand.vmem [shape: f32[6,128], index: 4, kind: input, shape index: {}]
  %s5 = inlined_call_operand.vmem [shape: f32[32,128], index: 5, kind: output, shape index: {}]
  %s6 = sld [smem:[#allocation0]]
  $region30: #{conv_block2d.1} parent=0
    _
  %s8 = ssub.s32 1, %s6
  %s9 = scalar_select 0, %s8, %s6
  // Predicated region
  $region2: #{conv_block2d.1} parent=0 // pred_check
    _
  $region3: #{conv_block2d.1} parent=0 // pred_check_branch
    %11 = sbr.rel (0) target = $region5
  $region4: #{conv_block2d.1} parent=0 // pred_region
    _
  $region5: #{conv_block2d.1} parent=0 // pred_fallthru
    _
  // Predicated region
  $region6: #{conv_block2d.1} parent=0 // pred_check
    _
  $region7: #{conv_block2d.1} parent=0 // pred_check_branch
    %13 = sbr.rel (0) target = $region9
  $region8: #{conv_block2d.1} parent=0 // pred_region
    _
  $region9: #{conv_block2d.1} parent=0 // pred_fallthru
    _
  // Predicated region
  $region10: #{conv_block2d.1} parent=0 // pred_check
    _
  $region11: #{conv_block2d.1} parent=0 // pred_check_branch
    %15 = sbr.rel (0) target = $region13
  $region12: #{conv_block2d.1} parent=0 // pred_region
    _
  $region13: #{conv_block2d.1} parent=0 // pred_fallthru
    _
  // Predicated region
  $region14: #{conv_block2d.1} parent=0 // pred_check
    _
  $region15: #{conv_block2d.1} parent=0 // pred_check_branch
    %17 = sbr.rel (0) target = $region17
  $region16: #{conv_block2d.1} parent=0 // pred_region
    _
  $region17: #{conv_block2d.1} parent=0 // pred_fallthru
    _
  // Predicated region
  $region18: #{conv_block2d.1} parent=0 // pred_check
    _
  $region19: #{conv_block2d.1} parent=0 // pred_check_branch
    %19 = sbr.rel (0) target = $region21
  $region20: #{conv_block2d.1} parent=0 // pred_region
    _
  $region21: #{conv_block2d.1} parent=0 // pred_fallthru
    _
  %v20 = vld [vmem:[%s0] sm:$0xff]
  %v21 = vld [vmem:[%s0 + $0x8] sm:$0xff]
  %v22 = vld [vmem:[%s0 + $0x10] sm:$0xff]
  %v23 = vld [vmem:[%s0 + $0x18] sm:$0xff]
  %v26 = vrot.slane %v21, 7
  %v27 = vrot.slane %v23, 7
  %vm32 = vcmask 1040384
  %v33 = vrot.slane %v20, 7
  %v34 = vsel %vm32, %v33, %v26
  %v35 = vrot.slane %v22, 7
  %v36 = vsel %vm32, %v35, %v27
  %v39 = vsel %vm32, %v26, %v33
  %v40 = vsel %vm32, %v27, %v35
  %43 = vrot.lane.b32.xlu0 %v39, 68
  %v44 = vpop.permute.xlu0 %43
  %45 = vrot.lane.b32.xlu0 %v34, 68
  %v46 = vpop.permute.xlu0 %45
  %47 = vrot.lane.b32.xlu0 %v40, 68
  %v48 = vpop.permute.xlu0 %47
  %49 = vrot.lane.b32.xlu0 %v36, 68
  %v50 = vpop.permute.xlu0 %49
  %55 = vrot.lane.b32.xlu0 %v39, 4
  %v56 = vpop.permute.xlu0 %55
  %57 = vrot.lane.b32.xlu0 %v34, 4
  %v58 = vpop.permute.xlu0 %57
  %59 = vrot.lane.b32.xlu0 %v40, 4
  %v60 = vpop.permute.xlu0 %59
  %61 = vrot.lane.b32.xlu0 %v36, 4
  %v62 = vpop.permute.xlu0 %61
  %vm67 = vcmask 31744
  %v68 = vsel %vm67, %v44, %v56
  %v69 = vsel %vm67, %v46, %v58
  %v70 = vsel %vm67, %v48, %v60
  %v71 = vsel %vm67, %v50, %v62
  %v72 = vld [vmem:[%s1] sm:$0xff]
  %v73 = vld [vmem:[%s1 + $0x8] sm:$0xff]
  %v74 = vld [vmem:[%s1 + $0x10] sm:$0xff]
  %v75 = vld [vmem:[%s1 + $0x18] sm:$0xff]
  %v76 = vld [vmem:[%s1 + $0x20] sm:$0xff]
  %v77 = vld [vmem:[%s1 + $0x28] sm:$0xff]
  %v78 = vld [vmem:[%s1 + $0x30] sm:$0xff]
  %v79 = vld [vmem:[%s1 + $0x38] sm:$0xff]
  %s80 = scalar_lea.vmem %s1, 64
  %v81 = vld [vmem:[%s80] sm:$0xff]
  %v82 = vld [vmem:[%s80 + $0x8] sm:$0xff]
  %v83 = vld [vmem:[%s80 + $0x10] sm:$0xff]
  %v84 = vld [vmem:[%s80 + $0x18] sm:$0xff]
  %v85 = vld [vmem:[%s80 + $0x20] sm:$0xff]
  %v86 = vld [vmem:[%s80 + $0x28] sm:$0xff]
  %v87 = vld [vmem:[%s80 + $0x30] sm:$0xff]
  %v88 = vld [vmem:[%s80 + $0x38] sm:$0xff]
  %vm89 = vcmask 523264
  %v90 = vsel %vm89, %v39, 0
  %v92 = vsel %vm89, %v34, 0
  %v94 = vsel %vm89, %v40, 0
  %v96 = vsel %vm89, %v36, 0
  %98 = vmatpush.msra.mxu0 0.0
  %99 = vmatpush.msra.mxu0 0.0
  %100 = vmatpush.msra.mxu0 0.0
  %101 = vmatpush.msra.mxu0 0.0
  %102 = vmatpush.msra.mxu0 0.0
  %103 = vmatpush.msra.mxu0 0.0
  %104 = vmatpush.msra.mxu0 0.0
  %105 = vmatpush.msra.mxu0 0.0
  %106 = vmatpush.msra.mxu0 %v88
  %107 = vmatpush.msra.mxu0 %v87
  %108 = vmatpush.msra.mxu0 %v86
  %109 = vmatpush.msra.mxu0 %v85
  %110 = vmatpush.msra.mxu0 %v84
  %111 = vmatpush.msra.mxu0 %v83
  %112 = vmatpush.msra.mxu0 %v82
  %113 = vmatpush.msra.mxu0 %v81
  %114 = vmatmul.f32.gmra.mxu0 %v90
  %v115 = vpop.f32.mrf.mxu0
  %v116 = vadd.f32 0.0, %v115
  %117 = vmatmul.f32.gmra.mxu0 %v92
  %v118 = vpop.f32.mrf.mxu0
  %v119 = vadd.f32 0.0, %v118
  %120 = vmatmul.f32.gmra.mxu0 %v94
  %v121 = vpop.f32.mrf.mxu0
  %v122 = vadd.f32 0.0, %v121
  %123 = vmatmul.f32.gmra.mxu0 %v96
  %v124 = vpop.f32.mrf.mxu0
  %v125 = vadd.f32 0.0, %v124
  %126 = vdwg.mxu0
  %v128 = vsel %vm89, %v68, 0
  %v131 = vsel %vm89, %v69, 0
  %v134 = vsel %vm89, %v70, 0
  %v137 = vsel %vm89, %v71, 0
  %139 = vmatpush.msra.mxu0 0.0
  %140 = vmatpush.msra.mxu0 0.0
  %141 = vmatpush.msra.mxu0 0.0
  %142 = vmatpush.msra.mxu0 0.0
  %143 = vmatpush.msra.mxu0 0.0
  %144 = vmatpush.msra.mxu0 0.0
  %145 = vmatpush.msra.mxu0 0.0
  %146 = vmatpush.msra.mxu0 0.0
  %147 = vmatpush.msra.mxu0 %v79
  %148 = vmatpush.msra.mxu0 %v78
  %149 = vmatpush.msra.mxu0 %v77
  %150 = vmatpush.msra.mxu0 %v76
  %151 = vmatpush.msra.mxu0 %v75
  %152 = vmatpush.msra.mxu0 %v74
  %153 = vmatpush.msra.mxu0 %v73
  %154 = vmatpush.msra.mxu0 %v72
  %155 = vmatmul.f32.gmra.mxu0 %v128
  %v156 = vpop.f32.mrf.mxu0
  %v157 = vadd.f32 %v116, %v156
  %158 = vmatmul.f32.gmra.mxu0 %v131
  %v159 = vpop.f32.mrf.mxu0
  %v160 = vadd.f32 %v119, %v159
  %161 = vmatmul.f32.gmra.mxu0 %v134
  %v162 = vpop.f32.mrf.mxu0
  %v163 = vadd.f32 %v122, %v162
  %164 = vmatmul.f32.gmra.mxu0 %v137
  %v165 = vpop.f32.mrf.mxu0
  %v166 = vadd.f32 %v125, %v165
  %167 = vdwg.mxu0
  %168 = vrot.lane.b32.xlu0 %v39, 124
  %v169 = vpop.permute.xlu0 %168
  %170 = vrot.lane.b32.xlu0 %v34, 124
  %v171 = vpop.permute.xlu0 %170
  %172 = vrot.lane.b32.xlu0 %v40, 124
  %v173 = vpop.permute.xlu0 %172
  %174 = vrot.lane.b32.xlu0 %v36, 124
  %v175 = vpop.permute.xlu0 %174
  %180 = vrot.lane.b32.xlu0 %v39, 60
  %v181 = vpop.permute.xlu0 %180
  %182 = vrot.lane.b32.xlu0 %v34, 60
  %v183 = vpop.permute.xlu0 %182
  %184 = vrot.lane.b32.xlu0 %v40, 60
  %v185 = vpop.permute.xlu0 %184
  %186 = vrot.lane.b32.xlu0 %v36, 60
  %v187 = vpop.permute.xlu0 %186
  %vm192 = vcmask 490496
  %v193 = vsel %vm192, %v169, %v181
  %v194 = vsel %vm192, %v171, %v183
  %v195 = vsel %vm192, %v173, %v185
  %v196 = vsel %vm192, %v175, %v187
  %s197 = scalar_lea.vmem %s1, 128
  %v198 = vld [vmem:[%s197] sm:$0xff]
  %v199 = vld [vmem:[%s197 + $0x8] sm:$0xff]
  %v200 = vld [vmem:[%s197 + $0x10] sm:$0xff]
  %v201 = vld [vmem:[%s197 + $0x18] sm:$0xff]
  %v202 = vld [vmem:[%s197 + $0x20] sm:$0xff]
  %v203 = vld [vmem:[%s197 + $0x28] sm:$0xff]
  %v204 = vld [vmem:[%s197 + $0x30] sm:$0xff]
  %v205 = vld [vmem:[%s197 + $0x38] sm:$0xff]
  %v207 = vsel %vm89, %v193, 0
  %v210 = vsel %vm89, %v194, 0
  %v213 = vsel %vm89, %v195, 0
  %v216 = vsel %vm89, %v196, 0
  %218 = vmatpush.msra.mxu0 0.0
  %219 = vmatpush.msra.mxu0 0.0
  %220 = vmatpush.msra.mxu0 0.0
  %221 = vmatpush.msra.mxu0 0.0
  %222 = vmatpush.msra.mxu0 0.0
  %223 = vmatpush.msra.mxu0 0.0
  %224 = vmatpush.msra.mxu0 0.0
  %225 = vmatpush.msra.mxu0 0.0
  %226 = vmatpush.msra.mxu0 %v205
  %227 = vmatpush.msra.mxu0 %v204
  %228 = vmatpush.msra.mxu0 %v203
  %229 = vmatpush.msra.mxu0 %v202
  %230 = vmatpush.msra.mxu0 %v201
  %231 = vmatpush.msra.mxu0 %v200
  %232 = vmatpush.msra.mxu0 %v199
  %233 = vmatpush.msra.mxu0 %v198
  %234 = vmatmul.f32.gmra.mxu0 %v207
  %v235 = vpop.f32.mrf.mxu0
  %v236 = vadd.f32 0.0, %v235
  %237 = vmatmul.f32.gmra.mxu0 %v210
  %v238 = vpop.f32.mrf.mxu0
  %v239 = vadd.f32 0.0, %v238
  %240 = vmatmul.f32.gmra.mxu0 %v213
  %v241 = vpop.f32.mrf.mxu0
  %v242 = vadd.f32 0.0, %v241
  %243 = vmatmul.f32.gmra.mxu0 %v216
  %v244 = vpop.f32.mrf.mxu0
  %v245 = vadd.f32 0.0, %v244
  %246 = vdwg.mxu0
  %v247 = vadd.f32 %v157, %v236
  %v248 = vadd.f32 %v160, %v239
  %v249 = vadd.f32 %v163, %v242
  %v250 = vadd.f32 %v166, %v245
  %251 = vrot.lane.b32.xlu0 %v20, 68
  %v252 = vpop.permute.xlu0 %251
  %253 = vrot.lane.b32.xlu0 %v21, 68
  %v254 = vpop.permute.xlu0 %253
  %255 = vrot.lane.b32.xlu0 %v22, 68
  %v256 = vpop.permute.xlu0 %255
  %257 = vrot.lane.b32.xlu0 %v23, 68
  %v258 = vpop.permute.xlu0 %257
  %263 = vrot.lane.b32.xlu0 %v20, 4
  %v264 = vpop.permute.xlu0 %263
  %265 = vrot.lane.b32.xlu0 %v21, 4
  %v266 = vpop.permute.xlu0 %265
  %267 = vrot.lane.b32.xlu0 %v22, 4
  %v268 = vpop.permute.xlu0 %267
  %269 = vrot.lane.b32.xlu0 %v23, 4
  %v270 = vpop.permute.xlu0 %269
  %v275 = vsel %vm67, %v252, %v264
  %v276 = vsel %vm67, %v254, %v266
  %v277 = vsel %vm67, %v256, %v268
  %v278 = vsel %vm67, %v258, %v270
  %s279 = scalar_lea.vmem %s1, 192
  %v280 = vld [vmem:[%s279] sm:$0xff]
  %v281 = vld [vmem:[%s279 + $0x8] sm:$0xff]
  %v282 = vld [vmem:[%s279 + $0x10] sm:$0xff]
  %v283 = vld [vmem:[%s279 + $0x18] sm:$0xff]
  %v284 = vld [vmem:[%s279 + $0x20] sm:$0xff]
  %v285 = vld [vmem:[%s279 + $0x28] sm:$0xff]
  %v286 = vld [vmem:[%s279 + $0x30] sm:$0xff]
  %v287 = vld [vmem:[%s279 + $0x38] sm:$0xff]
  %v289 = vsel %vm89, %v275, 0
  %v292 = vsel %vm89, %v276, 0
  %v295 = vsel %vm89, %v277, 0
  %v298 = vsel %vm89, %v278, 0
  %300 = vmatpush.msra.mxu0 0.0
  %301 = vmatpush.msra.mxu0 0.0
  %302 = vmatpush.msra.mxu0 0.0
  %303 = vmatpush.msra.mxu0 0.0
  %304 = vmatpush.msra.mxu0 0.0
  %305 = vmatpush.msra.mxu0 0.0
  %306 = vmatpush.msra.mxu0 0.0
  %307 = vmatpush.msra.mxu0 0.0
  %308 = vmatpush.msra.mxu0 %v287
  %309 = vmatpush.msra.mxu0 %v286
  %310 = vmatpush.msra.mxu0 %v285
  %311 = vmatpush.msra.mxu0 %v284
  %312 = vmatpush.msra.mxu0 %v283
  %313 = vmatpush.msra.mxu0 %v282
  %314 = vmatpush.msra.mxu0 %v281
  %315 = vmatpush.msra.mxu0 %v280
  %316 = vmatmul.f32.gmra.mxu0 %v289
  %v317 = vpop.f32.mrf.mxu0
  %v318 = vadd.f32 0.0, %v317
  %319 = vmatmul.f32.gmra.mxu0 %v292
  %v320 = vpop.f32.mrf.mxu0
  %v321 = vadd.f32 0.0, %v320
  %322 = vmatmul.f32.gmra.mxu0 %v295
  %v323 = vpop.f32.mrf.mxu0
  %v324 = vadd.f32 0.0, %v323
  %325 = vmatmul.f32.gmra.mxu0 %v298
  %v326 = vpop.f32.mrf.mxu0
  %v327 = vadd.f32 0.0, %v326
  %328 = vdwg.mxu0
  %v329 = vadd.f32 %v247, %v318
  %v330 = vadd.f32 %v248, %v321
  %v331 = vadd.f32 %v249, %v324
  %v332 = vadd.f32 %v250, %v327
  %s333 = scalar_lea.vmem %s1, 256
  %v334 = vld [vmem:[%s333] sm:$0xff]
  %v335 = vld [vmem:[%s333 + $0x8] sm:$0xff]
  %v336 = vld [vmem:[%s333 + $0x10] sm:$0xff]
  %v337 = vld [vmem:[%s333 + $0x18] sm:$0xff]
  %v338 = vld [vmem:[%s333 + $0x20] sm:$0xff]
  %v339 = vld [vmem:[%s333 + $0x28] sm:$0xff]
  %v340 = vld [vmem:[%s333 + $0x30] sm:$0xff]
  %v341 = vld [vmem:[%s333 + $0x38] sm:$0xff]
  %v342 = vsel %vm89, %v20, 0
  %v344 = vsel %vm89, %v21, 0
  %v346 = vsel %vm89, %v22, 0
  %v348 = vsel %vm89, %v23, 0
  %350 = vmatpush.msra.mxu0 0.0
  %351 = vmatpush.msra.mxu0 0.0
  %352 = vmatpush.msra.mxu0 0.0
  %353 = vmatpush.msra.mxu0 0.0
  %354 = vmatpush.msra.mxu0 0.0
  %355 = vmatpush.msra.mxu0 0.0
  %356 = vmatpush.msra.mxu0 0.0
  %357 = vmatpush.msra.mxu0 0.0
  %358 = vmatpush.msra.mxu0 %v341
  %359 = vmatpush.msra.mxu0 %v340
  %360 = vmatpush.msra.mxu0 %v339
  %361 = vmatpush.msra.mxu0 %v338
  %362 = vmatpush.msra.mxu0 %v337
  %363 = vmatpush.msra.mxu0 %v336
  %364 = vmatpush.msra.mxu0 %v335
  %365 = vmatpush.msra.mxu0 %v334
  %366 = vmatmul.f32.gmra.mxu0 %v342
  %v367 = vpop.f32.mrf.mxu0
  %v368 = vadd.f32 0.0, %v367
  %369 = vmatmul.f32.gmra.mxu0 %v344
  %v370 = vpop.f32.mrf.mxu0
  %v371 = vadd.f32 0.0, %v370
  %372 = vmatmul.f32.gmra.mxu0 %v346
  %v373 = vpop.f32.mrf.mxu0
  %v374 = vadd.f32 0.0, %v373
  %375 = vmatmul.f32.gmra.mxu0 %v348
  %v376 = vpop.f32.mrf.mxu0
  %v377 = vadd.f32 0.0, %v376
  %378 = vdwg.mxu0
  %v379 = vadd.f32 %v329, %v368
  %v380 = vadd.f32 %v330, %v371
  %v381 = vadd.f32 %v331, %v374
  %v382 = vadd.f32 %v332, %v377
  %383 = vrot.lane.b32.xlu0 %v20, 124
  %v384 = vpop.permute.xlu0 %383
  %385 = vrot.lane.b32.xlu0 %v21, 124
  %v386 = vpop.permute.xlu0 %385
  %387 = vrot.lane.b32.xlu0 %v22, 124
  %v388 = vpop.permute.xlu0 %387
  %389 = vrot.lane.b32.xlu0 %v23, 124
  %v390 = vpop.permute.xlu0 %389
  %395 = vrot.lane.b32.xlu0 %v20, 60
  %v396 = vpop.permute.xlu0 %395
  %397 = vrot.lane.b32.xlu0 %v21, 60
  %v398 = vpop.permute.xlu0 %397
  %399 = vrot.lane.b32.xlu0 %v22, 60
  %v400 = vpop.permute.xlu0 %399
  %401 = vrot.lane.b32.xlu0 %v23, 60
  %v402 = vpop.permute.xlu0 %401
  %v407 = vsel %vm192, %v384, %v396
  %v408 = vsel %vm192, %v386, %v398
  %v409 = vsel %vm192, %v388, %v400
  %v410 = vsel %vm192, %v390, %v402
  %s411 = scalar_lea.vmem %s1, 320
  %v412 = vld [vmem:[%s411] sm:$0xff]
  %v413 = vld [vmem:[%s411 + $0x8] sm:$0xff]
  %v414 = vld [vmem:[%s411 + $0x10] sm:$0xff]
  %v415 = vld [vmem:[%s411 + $0x18] sm:$0xff]
  %v416 = vld [vmem:[%s411 + $0x20] sm:$0xff]
  %v417 = vld [vmem:[%s411 + $0x28] sm:$0xff]
  %v418 = vld [vmem:[%s411 + $0x30] sm:$0xff]
  %v419 = vld [vmem:[%s411 + $0x38] sm:$0xff]
  %v421 = vsel %vm89, %v407, 0
  %v424 = vsel %vm89, %v408, 0
  %v427 = vsel %vm89, %v409, 0
  %v430 = vsel %vm89, %v410, 0
  %432 = vmatpush.msra.mxu0 0.0
  %433 = vmatpush.msra.mxu0 0.0
  %434 = vmatpush.msra.mxu0 0.0
  %435 = vmatpush.msra.mxu0 0.0
  %436 = vmatpush.msra.mxu0 0.0
  %437 = vmatpush.msra.mxu0 0.0
  %438 = vmatpush.msra.mxu0 0.0
  %439 = vmatpush.msra.mxu0 0.0
  %440 = vmatpush.msra.mxu0 %v419
  %441 = vmatpush.msra.mxu0 %v418
  %442 = vmatpush.msra.mxu0 %v417
  %443 = vmatpush.msra.mxu0 %v416
  %444 = vmatpush.msra.mxu0 %v415
  %445 = vmatpush.msra.mxu0 %v414
  %446 = vmatpush.msra.mxu0 %v413
  %447 = vmatpush.msra.mxu0 %v412
  %448 = vmatmul.f32.gmra.mxu0 %v421
  %v449 = vpop.f32.mrf.mxu0
  %v450 = vadd.f32 0.0, %v449
  %451 = vmatmul.f32.gmra.mxu0 %v424
  %v452 = vpop.f32.mrf.mxu0
  %v453 = vadd.f32 0.0, %v452
  %454 = vmatmul.f32.gmra.mxu0 %v427
  %v455 = vpop.f32.mrf.mxu0
  %v456 = vadd.f32 0.0, %v455
  %457 = vmatmul.f32.gmra.mxu0 %v430
  %v458 = vpop.f32.mrf.mxu0
  %v459 = vadd.f32 0.0, %v458
  %460 = vdwg.mxu0
  %v461 = vadd.f32 %v379, %v450
  %v462 = vadd.f32 %v380, %v453
  %v463 = vadd.f32 %v381, %v456
  %v464 = vadd.f32 %v382, %v459
  %vm465 = vcmask 1046528
  %v466 = vrot.slane %v20, 1
  %v467 = vrot.slane %v21, 1
  %v468 = vsel %vm465, %v466, %v467
  %v469 = vrot.slane %v22, 1
  %v470 = vrot.slane %v23, 1
  %v471 = vsel %vm465, %v469, %v470
  %v476 = vsel %vm465, %v467, %v466
  %v477 = vsel %vm465, %v470, %v469
  %480 = vrot.lane.b32.xlu0 %v468, 68
  %v481 = vpop.permute.xlu0 %480
  %482 = vrot.lane.b32.xlu0 %v476, 68
  %v483 = vpop.permute.xlu0 %482
  %484 = vrot.lane.b32.xlu0 %v471, 68
  %v485 = vpop.permute.xlu0 %484
  %486 = vrot.lane.b32.xlu0 %v477, 68
  %v487 = vpop.permute.xlu0 %486
  %492 = vrot.lane.b32.xlu0 %v468, 4
  %v493 = vpop.permute.xlu0 %492
  %494 = vrot.lane.b32.xlu0 %v476, 4
  %v495 = vpop.permute.xlu0 %494
  %496 = vrot.lane.b32.xlu0 %v471, 4
  %v497 = vpop.permute.xlu0 %496
  %498 = vrot.lane.b32.xlu0 %v477, 4
  %v499 = vpop.permute.xlu0 %498
  %v504 = vsel %vm67, %v481, %v493
  %v505 = vsel %vm67, %v483, %v495
  %v506 = vsel %vm67, %v485, %v497
  %v507 = vsel %vm67, %v487, %v499
  %s508 = scalar_lea.vmem %s1, 384
  %v509 = vld [vmem:[%s508] sm:$0xff]
  %v510 = vld [vmem:[%s508 + $0x8] sm:$0xff]
  %v511 = vld [vmem:[%s508 + $0x10] sm:$0xff]
  %v512 = vld [vmem:[%s508 + $0x18] sm:$0xff]
  %v513 = vld [vmem:[%s508 + $0x20] sm:$0xff]
  %v514 = vld [vmem:[%s508 + $0x28] sm:$0xff]
  %v515 = vld [vmem:[%s508 + $0x30] sm:$0xff]
  %v516 = vld [vmem:[%s508 + $0x38] sm:$0xff]
  %v518 = vsel %vm89, %v504, 0
  %v521 = vsel %vm89, %v505, 0
  %v524 = vsel %vm89, %v506, 0
  %v527 = vsel %vm89, %v507, 0
  %529 = vmatpush.msra.mxu0 0.0
  %530 = vmatpush.msra.mxu0 0.0
  %531 = vmatpush.msra.mxu0 0.0
  %532 = vmatpush.msra.mxu0 0.0
  %533 = vmatpush.msra.mxu0 0.0
  %534 = vmatpush.msra.mxu0 0.0
  %535 = vmatpush.msra.mxu0 0.0
  %536 = vmatpush.msra.mxu0 0.0
  %537 = vmatpush.msra.mxu0 %v516
  %538 = vmatpush.msra.mxu0 %v515
  %539 = vmatpush.msra.mxu0 %v514
  %540 = vmatpush.msra.mxu0 %v513
  %541 = vmatpush.msra.mxu0 %v512
  %542 = vmatpush.msra.mxu0 %v511
  %543 = vmatpush.msra.mxu0 %v510
  %544 = vmatpush.msra.mxu0 %v509
  %545 = vmatmul.f32.gmra.mxu0 %v518
  %v546 = vpop.f32.mrf.mxu0
  %v547 = vadd.f32 0.0, %v546
  %548 = vmatmul.f32.gmra.mxu0 %v521
  %v549 = vpop.f32.mrf.mxu0
  %v550 = vadd.f32 0.0, %v549
  %551 = vmatmul.f32.gmra.mxu0 %v524
  %v552 = vpop.f32.mrf.mxu0
  %v553 = vadd.f32 0.0, %v552
  %554 = vmatmul.f32.gmra.mxu0 %v527
  %v555 = vpop.f32.mrf.mxu0
  %v556 = vadd.f32 0.0, %v555
  %557 = vdwg.mxu0
  %v558 = vadd.f32 %v461, %v547
  %v559 = vadd.f32 %v462, %v550
  %v560 = vadd.f32 %v463, %v553
  %v561 = vadd.f32 %v464, %v556
  %s562 = scalar_lea.vmem %s1, 448
  %v563 = vld [vmem:[%s562] sm:$0xff]
  %v564 = vld [vmem:[%s562 + $0x8] sm:$0xff]
  %v565 = vld [vmem:[%s562 + $0x10] sm:$0xff]
  %v566 = vld [vmem:[%s562 + $0x18] sm:$0xff]
  %v567 = vld [vmem:[%s562 + $0x20] sm:$0xff]
  %v568 = vld [vmem:[%s562 + $0x28] sm:$0xff]
  %v569 = vld [vmem:[%s562 + $0x30] sm:$0xff]
  %v570 = vld [vmem:[%s562 + $0x38] sm:$0xff]
  %v571 = vsel %vm89, %v468, 0
  %v573 = vsel %vm89, %v476, 0
  %v575 = vsel %vm89, %v471, 0
  %v577 = vsel %vm89, %v477, 0
  %579 = vmatpush.msra.mxu0 0.0
  %580 = vmatpush.msra.mxu0 0.0
  %581 = vmatpush.msra.mxu0 0.0
  %582 = vmatpush.msra.mxu0 0.0
  %583 = vmatpush.msra.mxu0 0.0
  %584 = vmatpush.msra.mxu0 0.0
  %585 = vmatpush.msra.mxu0 0.0
  %586 = vmatpush.msra.mxu0 0.0
  %587 = vmatpush.msra.mxu0 %v570
  %588 = vmatpush.msra.mxu0 %v569
  %589 = vmatpush.msra.mxu0 %v568
  %590 = vmatpush.msra.mxu0 %v567
  %591 = vmatpush.msra.mxu0 %v566
  %592 = vmatpush.msra.mxu0 %v565
  %593 = vmatpush.msra.mxu0 %v564
  %594 = vmatpush.msra.mxu0 %v563
  %595 = vmatmul.f32.gmra.mxu0 %v571
  %v596 = vpop.f32.mrf.mxu0
  %v597 = vadd.f32 0.0, %v596
  %598 = vmatmul.f32.gmra.mxu0 %v573
  %v599 = vpop.f32.mrf.mxu0
  %v600 = vadd.f32 0.0, %v599
  %601 = vmatmul.f32.gmra.mxu0 %v575
  %v602 = vpop.f32.mrf.mxu0
  %v603 = vadd.f32 0.0, %v602
  %604 = vmatmul.f32.gmra.mxu0 %v577
  %v605 = vpop.f32.mrf.mxu0
  %v606 = vadd.f32 0.0, %v605
  %607 = vdwg.mxu0
  %v608 = vadd.f32 %v558, %v597
  %v609 = vadd.f32 %v559, %v600
  %v610 = vadd.f32 %v560, %v603
  %v611 = vadd.f32 %v561, %v606
  %612 = vrot.lane.b32.xlu0 %v468, 124
  %v613 = vpop.permute.xlu0 %612
  %614 = vrot.lane.b32.xlu0 %v476, 124
  %v615 = vpop.permute.xlu0 %614
  %616 = vrot.lane.b32.xlu0 %v471, 124
  %v617 = vpop.permute.xlu0 %616
  %618 = vrot.lane.b32.xlu0 %v477, 124
  %v619 = vpop.permute.xlu0 %618
  %624 = vrot.lane.b32.xlu0 %v468, 60
  %v625 = vpop.permute.xlu0 %624
  %626 = vrot.lane.b32.xlu0 %v476, 60
  %v627 = vpop.permute.xlu0 %626
  %628 = vrot.lane.b32.xlu0 %v471, 60
  %v629 = vpop.permute.xlu0 %628
  %630 = vrot.lane.b32.xlu0 %v477, 60
  %v631 = vpop.permute.xlu0 %630
  %v636 = vsel %vm192, %v613, %v625
  %v637 = vsel %vm192, %v615, %v627
  %v638 = vsel %vm192, %v617, %v629
  %v639 = vsel %vm192, %v619, %v631
  %s640 = scalar_lea.vmem %s1, 512
  %v641 = vld [vmem:[%s640] sm:$0xff]
  %v642 = vld [vmem:[%s640 + $0x8] sm:$0xff]
  %v643 = vld [vmem:[%s640 + $0x10] sm:$0xff]
  %v644 = vld [vmem:[%s640 + $0x18] sm:$0xff]
  %v645 = vld [vmem:[%s640 + $0x20] sm:$0xff]
  %v646 = vld [vmem:[%s640 + $0x28] sm:$0xff]
  %v647 = vld [vmem:[%s640 + $0x30] sm:$0xff]
  %v648 = vld [vmem:[%s640 + $0x38] sm:$0xff]
  %v650 = vsel %vm89, %v636, 0
  %v653 = vsel %vm89, %v637, 0
  %v656 = vsel %vm89, %v638, 0
  %v659 = vsel %vm89, %v639, 0
  %661 = vmatpush.msra.mxu0 0.0
  %662 = vmatpush.msra.mxu0 0.0
  %663 = vmatpush.msra.mxu0 0.0
  %664 = vmatpush.msra.mxu0 0.0
  %665 = vmatpush.msra.mxu0 0.0
  %666 = vmatpush.msra.mxu0 0.0
  %667 = vmatpush.msra.mxu0 0.0
  %668 = vmatpush.msra.mxu0 0.0
  %669 = vmatpush.msra.mxu0 %v648
  %670 = vmatpush.msra.mxu0 %v647
  %671 = vmatpush.msra.mxu0 %v646
  %672 = vmatpush.msra.mxu0 %v645
  %673 = vmatpush.msra.mxu0 %v644
  %674 = vmatpush.msra.mxu0 %v643
  %675 = vmatpush.msra.mxu0 %v642
  %676 = vmatpush.msra.mxu0 %v641
  %677 = vmatmul.f32.gmra.mxu0 %v650
  %v678 = vpop.f32.mrf.mxu0
  %v679 = vadd.f32 0.0, %v678
  %680 = vmatmul.f32.gmra.mxu0 %v653
  %v681 = vpop.f32.mrf.mxu0
  %v682 = vadd.f32 0.0, %v681
  %683 = vmatmul.f32.gmra.mxu0 %v656
  %v684 = vpop.f32.mrf.mxu0
  %v685 = vadd.f32 0.0, %v684
  %686 = vmatmul.f32.gmra.mxu0 %v659
  %v687 = vpop.f32.mrf.mxu0
  %v688 = vadd.f32 0.0, %v687
  %689 = vdwg.mxu0
  %v690 = vadd.f32 %v608, %v679
  %v691 = vadd.f32 %v609, %v682
  %v692 = vadd.f32 %v610, %v685
  %v693 = vadd.f32 %v611, %v688
  %v694 = vld [vmem:[%s4] sm:$0x1]
  %v695 = vld [vmem:[%s4 + $0x1] sm:$0x1]
  %v696 = vadd.f32 %v690, %v691
  %v697 = vadd.f32 %v696, %v692
  %v698 = vadd.f32 %v697, %v693
  %v699 = vrot.slane %v698, 4
  %v700 = vadd.f32 %v698, %v699
  %v701 = vrot.slane %v700, 2
  %v702 = vadd.f32 %v700, %v701
  %v703 = vrot.slane %v702, 1
  %v704 = vadd.f32 %v702, %v703
  %706 = vrot.lane.b32.xlu0 %v704, 64
  %v707 = vpop.permute.xlu0 %706
  %v709 = vadd.f32 %v704, %v707
  %711 = vrot.lane.b32.xlu0 %v709, 96
  %v712 = vpop.permute.xlu0 %711
  %v714 = vadd.f32 %v709, %v712
  %716 = vrot.lane.b32.xlu0 %v714, 112
  %v717 = vpop.permute.xlu0 %716
  %v719 = vadd.f32 %v714, %v717
  %721 = vrot.lane.b32.xlu0 %v719, 120
  %v722 = vpop.permute.xlu0 %721
  %v724 = vadd.f32 %v719, %v722
  %v725 = vmul.f32 %v724, 0.001953125
  %v726 = vperm.slane %v725, 0
  %v727 = vsub.f32 %v690, %v726
  %v728 = vsub.f32 %v691, %v726
  %v729 = vsub.f32 %v692, %v726
  %v730 = vsub.f32 %v693, %v726
  %v731 = vmul.f32 %v727, %v727
  %v732 = vmul.f32 %v728, %v728
  %v733 = vmul.f32 %v729, %v729
  %v734 = vmul.f32 %v730, %v730
  %v735 = vadd.f32 %v731, %v732
  %v736 = vadd.f32 %v735, %v733
  %v737 = vadd.f32 %v736, %v734
  %v738 = vrot.slane %v737, 4
  %v739 = vadd.f32 %v737, %v738
  %v740 = vrot.slane %v739, 2
  %v741 = vadd.f32 %v739, %v740
  %v742 = vrot.slane %v741, 1
  %v743 = vadd.f32 %v741, %v742
  %745 = vrot.lane.b32.xlu0 %v743, 64
  %v746 = vpop.permute.xlu0 %745
  %v748 = vadd.f32 %v743, %v746
  %750 = vrot.lane.b32.xlu0 %v748, 96
  %v751 = vpop.permute.xlu0 %750
  %v753 = vadd.f32 %v748, %v751
  %755 = vrot.lane.b32.xlu0 %v753, 112
  %v756 = vpop.permute.xlu0 %755
  %v758 = vadd.f32 %v753, %v756
  %760 = vrot.lane.b32.xlu0 %v758, 120
  %v761 = vpop.permute.xlu0 %760
  %v763 = vadd.f32 %v758, %v761
  %v764 = vmul.f32 %v763, 0.001953125
  %v765 = vadd.f32 %v764, 1e-05
  %v766 = vrsqrt.pop %v765
  %v767 = vmul.f32 %v766, %v765
  %v768 = vmul.f32 %v767, %v766
  %v769 = vmul.f32 0.5, %v768
  %v770 = vsub.f32 1.5, %v769
  %v771 = vmul.f32 %v766, %v770
  %vm772 = vweird.f32 %v765
  %vm773 = vweird.f32 %v766
  %vm774 = vmor %vm772, %vm773
  %v775 = vsel %vm774, %v766, %v771
  %v776 = vmul.f32 %v694, %v775
  %v777 = vperm.slane %v776, 0
  %v778 = vmul.f32 %v727, %v777
  %v779 = vmul.f32 %v728, %v777
  %v780 = vmul.f32 %v729, %v777
  %v781 = vmul.f32 %v730, %v777
  %v782 = vperm.slane %v695, 0
  %v783 = vadd.f32 %v778, %v782
  %v784 = vadd.f32 %v779, %v782
  %v785 = vadd.f32 %v780, %v782
  %v786 = vadd.f32 %v781, %v782
  %vm787 = vcmp.ge.f32.partialorder %v783, 0.0
  %vm788 = vcmp.ge.f32.partialorder %v784, 0.0
  %vm789 = vcmp.ge.f32.partialorder %v785, 0.0
  %vm790 = vcmp.ge.f32.partialorder %v786, 0.0
  %v791 = vmul.f32 %v783, 0.01
  %v792 = vmul.f32 %v784, 0.01
  %v793 = vmul.f32 %v785, 0.01
  %v794 = vmul.f32 %v786, 0.01
  %v795 = vsel %vm787, %v783, %v791
  %v796 = vsel %vm788, %v784, %v792
  %v797 = vsel %vm789, %v785, %v793
  %v798 = vsel %vm790, %v786, %v794
  %v801 = vrot.slane %v796, 7
  %v802 = vrot.slane %v798, 7
  %v807 = vrot.slane %v795, 7
  %v808 = vsel %vm32, %v807, %v801
  %v809 = vrot.slane %v797, 7
  %v810 = vsel %vm32, %v809, %v802
  %v815 = vsel %vm32, %v801, %v807
  %v816 = vsel %vm32, %v802, %v809
  %819 = vrot.lane.b32.xlu0 %v815, 8
  %v820 = vpop.permute.xlu0 %819
  %821 = vrot.lane.b32.xlu0 %v808, 8
  %v822 = vpop.permute.xlu0 %821
  %823 = vrot.lane.b32.xlu0 %v816, 8
  %v824 = vpop.permute.xlu0 %823
  %825 = vrot.lane.b32.xlu0 %v810, 8
  %v826 = vpop.permute.xlu0 %825
  %v831 = vld [vmem:[%s2] sm:$0xff]
  %v832 = vld [vmem:[%s2 + $0x8] sm:$0xff]
  %v833 = vld [vmem:[%s2 + $0x10] sm:$0xff]
  %v834 = vld [vmem:[%s2 + $0x18] sm:$0xff]
  %v835 = vld [vmem:[%s2 + $0x20] sm:$0xff]
  %v836 = vld [vmem:[%s2 + $0x28] sm:$0xff]
  %v837 = vld [vmem:[%s2 + $0x30] sm:$0xff]
  %v838 = vld [vmem:[%s2 + $0x38] sm:$0xff]
  %v839 = vld [vmem:[%s2 + $0x40] sm:$0xff]
  %v840 = vld [vmem:[%s2 + $0x48] sm:$0xff]
  %v841 = vld [vmem:[%s2 + $0x50] sm:$0xff]
  %v842 = vld [vmem:[%s2 + $0x58] sm:$0xff]
  %v843 = vld [vmem:[%s2 + $0x60] sm:$0xff]
  %v844 = vld [vmem:[%s2 + $0x68] sm:$0xff]
  %v845 = vld [vmem:[%s2 + $0x70] sm:$0xff]
  %v846 = vld [vmem:[%s2 + $0x78] sm:$0xff]
  %s847 = scalar_lea.vmem %s2, 128
  %v848 = vld [vmem:[%s847] sm:$0xff]
  %v849 = vld [vmem:[%s847 + $0x8] sm:$0xff]
  %v850 = vld [vmem:[%s847 + $0x10] sm:$0xff]
  %v851 = vld [vmem:[%s847 + $0x18] sm:$0xff]
  %v852 = vld [vmem:[%s847 + $0x20] sm:$0xff]
  %v853 = vld [vmem:[%s847 + $0x28] sm:$0xff]
  %v854 = vld [vmem:[%s847 + $0x30] sm:$0xff]
  %v855 = vld [vmem:[%s847 + $0x38] sm:$0xff]
  %v856 = vld [vmem:[%s847 + $0x40] sm:$0xff]
  %v857 = vld [vmem:[%s847 + $0x48] sm:$0xff]
  %v858 = vld [vmem:[%s847 + $0x50] sm:$0xff]
  %v859 = vld [vmem:[%s847 + $0x58] sm:$0xff]
  %v860 = vld [vmem:[%s847 + $0x60] sm:$0xff]
  %v861 = vld [vmem:[%s847 + $0x68] sm:$0xff]
  %v862 = vld [vmem:[%s847 + $0x70] sm:$0xff]
  %v863 = vld [vmem:[%s847 + $0x78] sm:$0xff]
  %864 = vmatpush.msra.mxu0 %v863
  %865 = vmatpush.msra.mxu0 %v862
  %866 = vmatpush.msra.mxu0 %v861
  %867 = vmatpush.msra.mxu0 %v860
  %868 = vmatpush.msra.mxu0 %v859
  %869 = vmatpush.msra.mxu0 %v858
  %870 = vmatpush.msra.mxu0 %v857
  %871 = vmatpush.msra.mxu0 %v856
  %872 = vmatpush.msra.mxu0 %v855
  %873 = vmatpush.msra.mxu0 %v854
  %874 = vmatpush.msra.mxu0 %v853
  %875 = vmatpush.msra.mxu0 %v852
  %876 = vmatpush.msra.mxu0 %v851
  %877 = vmatpush.msra.mxu0 %v850
  %878 = vmatpush.msra.mxu0 %v849
  %879 = vmatpush.msra.mxu0 %v848
  %880 = vmatmul.f32.gmra.mxu0 %v815
  %v881 = vpop.f32.mrf.mxu0
  %v882 = vadd.f32 0.0, %v881
  %883 = vmatmul.f32.gmra.mxu0 %v808
  %v884 = vpop.f32.mrf.mxu0
  %v885 = vadd.f32 0.0, %v884
  %886 = vmatmul.f32.gmra.mxu0 %v816
  %v887 = vpop.f32.mrf.mxu0
  %v888 = vadd.f32 0.0, %v887
  %889 = vmatmul.f32.gmra.mxu0 %v810
  %v890 = vpop.f32.mrf.mxu0
  %v891 = vadd.f32 0.0, %v890
  %892 = vdwg.mxu0
  %893 = vmatpush.msra.mxu0 %v846
  %894 = vmatpush.msra.mxu0 %v845
  %895 = vmatpush.msra.mxu0 %v844
  %896 = vmatpush.msra.mxu0 %v843
  %897 = vmatpush.msra.mxu0 %v842
  %898 = vmatpush.msra.mxu0 %v841
  %899 = vmatpush.msra.mxu0 %v840
  %900 = vmatpush.msra.mxu0 %v839
  %901 = vmatpush.msra.mxu0 %v838
  %902 = vmatpush.msra.mxu0 %v837
  %903 = vmatpush.msra.mxu0 %v836
  %904 = vmatpush.msra.mxu0 %v835
  %905 = vmatpush.msra.mxu0 %v834
  %906 = vmatpush.msra.mxu0 %v833
  %907 = vmatpush.msra.mxu0 %v832
  %908 = vmatpush.msra.mxu0 %v831
  %909 = vmatmul.f32.gmra.mxu0 %v820
  %v910 = vpop.f32.mrf.mxu0
  %v911 = vadd.f32 %v882, %v910
  %912 = vmatmul.f32.gmra.mxu0 %v822
  %v913 = vpop.f32.mrf.mxu0
  %v914 = vadd.f32 %v885, %v913
  %915 = vmatmul.f32.gmra.mxu0 %v824
  %v916 = vpop.f32.mrf.mxu0
  %v917 = vadd.f32 %v888, %v916
  %918 = vmatmul.f32.gmra.mxu0 %v826
  %v919 = vpop.f32.mrf.mxu0
  %v920 = vadd.f32 %v891, %v919
  %921 = vdwg.mxu0
  %922 = vrot.lane.b32.xlu0 %v815, 120
  %v923 = vpop.permute.xlu0 %922
  %924 = vrot.lane.b32.xlu0 %v808, 120
  %v925 = vpop.permute.xlu0 %924
  %926 = vrot.lane.b32.xlu0 %v816, 120
  %v927 = vpop.permute.xlu0 %926
  %928 = vrot.lane.b32.xlu0 %v810, 120
  %v929 = vpop.permute.xlu0 %928
  %s934 = scalar_lea.vmem %s2, 256
  %v935 = vld [vmem:[%s934] sm:$0xff]
  %v936 = vld [vmem:[%s934 + $0x8] sm:$0xff]
  %v937 = vld [vmem:[%s934 + $0x10] sm:$0xff]
  %v938 = vld [vmem:[%s934 + $0x18] sm:$0xff]
  %v939 = vld [vmem:[%s934 + $0x20] sm:$0xff]
  %v940 = vld [vmem:[%s934 + $0x28] sm:$0xff]
  %v941 = vld [vmem:[%s934 + $0x30] sm:$0xff]
  %v942 = vld [vmem:[%s934 + $0x38] sm:$0xff]
  %v943 = vld [vmem:[%s934 + $0x40] sm:$0xff]
  %v944 = vld [vmem:[%s934 + $0x48] sm:$0xff]
  %v945 = vld [vmem:[%s934 + $0x50] sm:$0xff]
  %v946 = vld [vmem:[%s934 + $0x58] sm:$0xff]
  %v947 = vld [vmem:[%s934 + $0x60] sm:$0xff]
  %v948 = vld [vmem:[%s934 + $0x68] sm:$0xff]
  %v949 = vld [vmem:[%s934 + $0x70] sm:$0xff]
  %v950 = vld [vmem:[%s934 + $0x78] sm:$0xff]
  %951 = vmatpush.msra.mxu0 %v950
  %952 = vmatpush.msra.mxu0 %v949
  %953 = vmatpush.msra.mxu0 %v948
  %954 = vmatpush.msra.mxu0 %v947
  %955 = vmatpush.msra.mxu0 %v946
  %956 = vmatpush.msra.mxu0 %v945
  %957 = vmatpush.msra.mxu0 %v944
  %958 = vmatpush.msra.mxu0 %v943
  %959 = vmatpush.msra.mxu0 %v942
  %960 = vmatpush.msra.mxu0 %v941
  %961 = vmatpush.msra.mxu0 %v940
  %962 = vmatpush.msra.mxu0 %v939
  %963 = vmatpush.msra.mxu0 %v938
  %964 = vmatpush.msra.mxu0 %v937
  %965 = vmatpush.msra.mxu0 %v936
  %966 = vmatpush.msra.mxu0 %v935
  %967 = vmatmul.f32.gmra.mxu0 %v923
  %v968 = vpop.f32.mrf.mxu0
  %v969 = vadd.f32 0.0, %v968
  %970 = vmatmul.f32.gmra.mxu0 %v925
  %v971 = vpop.f32.mrf.mxu0
  %v972 = vadd.f32 0.0, %v971
  %973 = vmatmul.f32.gmra.mxu0 %v927
  %v974 = vpop.f32.mrf.mxu0
  %v975 = vadd.f32 0.0, %v974
  %976 = vmatmul.f32.gmra.mxu0 %v929
  %v977 = vpop.f32.mrf.mxu0
  %v978 = vadd.f32 0.0, %v977
  %979 = vdwg.mxu0
  %v980 = vadd.f32 %v911, %v969
  %v981 = vadd.f32 %v914, %v972
  %v982 = vadd.f32 %v917, %v975
  %v983 = vadd.f32 %v920, %v978
  %984 = vrot.lane.b32.xlu0 %v795, 8
  %v985 = vpop.permute.xlu0 %984
  %986 = vrot.lane.b32.xlu0 %v796, 8
  %v987 = vpop.permute.xlu0 %986
  %988 = vrot.lane.b32.xlu0 %v797, 8
  %v989 = vpop.permute.xlu0 %988
  %990 = vrot.lane.b32.xlu0 %v798, 8
  %v991 = vpop.permute.xlu0 %990
  %s996 = scalar_lea.vmem %s2, 384
  %v997 = vld [vmem:[%s996] sm:$0xff]
  %v998 = vld [vmem:[%s996 + $0x8] sm:$0xff]
  %v999 = vld [vmem:[%s996 + $0x10] sm:$0xff]
  %v1000 = vld [vmem:[%s996 + $0x18] sm:$0xff]
  %v1001 = vld [vmem:[%s996 + $0x20] sm:$0xff]
  %v1002 = vld [vmem:[%s996 + $0x28] sm:$0xff]
  %v1003 = vld [vmem:[%s996 + $0x30] sm:$0xff]
  %v1004 = vld [vmem:[%s996 + $0x38] sm:$0xff]
  %v1005 = vld [vmem:[%s996 + $0x40] sm:$0xff]
  %v1006 = vld [vmem:[%s996 + $0x48] sm:$0xff]
  %v1007 = vld [vmem:[%s996 + $0x50] sm:$0xff]
  %v1008 = vld [vmem:[%s996 + $0x58] sm:$0xff]
  %v1009 = vld [vmem:[%s996 + $0x60] sm:$0xff]
  %v1010 = vld [vmem:[%s996 + $0x68] sm:$0xff]
  %v1011 = vld [vmem:[%s996 + $0x70] sm:$0xff]
  %v1012 = vld [vmem:[%s996 + $0x78] sm:$0xff]
  %1013 = vmatpush.msra.mxu0 %v1012
  %1014 = vmatpush.msra.mxu0 %v1011
  %1015 = vmatpush.msra.mxu0 %v1010
  %1016 = vmatpush.msra.mxu0 %v1009
  %1017 = vmatpush.msra.mxu0 %v1008
  %1018 = vmatpush.msra.mxu0 %v1007
  %1019 = vmatpush.msra.mxu0 %v1006
  %1020 = vmatpush.msra.mxu0 %v1005
  %1021 = vmatpush.msra.mxu0 %v1004
  %1022 = vmatpush.msra.mxu0 %v1003
  %1023 = vmatpush.msra.mxu0 %v1002
  %1024 = vmatpush.msra.mxu0 %v1001
  %1025 = vmatpush.msra.mxu0 %v1000
  %1026 = vmatpush.msra.mxu0 %v999
  %1027 = vmatpush.msra.mxu0 %v998
  %1028 = vmatpush.msra.mxu0 %v997
  %1029 = vmatmul.f32.gmra.mxu0 %v985
  %v1030 = vpop.f32.mrf.mxu0
  %v1031 = vadd.f32 0.0, %v1030
  %1032 = vmatmul.f32.gmra.mxu0 %v987
  %v1033 = vpop.f32.mrf.mxu0
  %v1034 = vadd.f32 0.0, %v1033
  %1035 = vmatmul.f32.gmra.mxu0 %v989
  %v1036 = vpop.f32.mrf.mxu0
  %v1037 = vadd.f32 0.0, %v1036
  %1038 = vmatmul.f32.gmra.mxu0 %v991
  %v1039 = vpop.f32.mrf.mxu0
  %v1040 = vadd.f32 0.0, %v1039
  %1041 = vdwg.mxu0
  %v1042 = vadd.f32 %v980, %v1031
  %v1043 = vadd.f32 %v981, %v1034
  %v1044 = vadd.f32 %v982, %v1037
  %v1045 = vadd.f32 %v983, %v1040
  %s1046 = scalar_lea.vmem %s2, 512
  %v1047 = vld [vmem:[%s1046] sm:$0xff]
  %v1048 = vld [vmem:[%s1046 + $0x8] sm:$0xff]
  %v1049 = vld [vmem:[%s1046 + $0x10] sm:$0xff]
  %v1050 = vld [vmem:[%s1046 + $0x18] sm:$0xff]
  %v1051 = vld [vmem:[%s1046 + $0x20] sm:$0xff]
  %v1052 = vld [vmem:[%s1046 + $0x28] sm:$0xff]
  %v1053 = vld [vmem:[%s1046 + $0x30] sm:$0xff]
  %v1054 = vld [vmem:[%s1046 + $0x38] sm:$0xff]
  %v1055 = vld [vmem:[%s1046 + $0x40] sm:$0xff]
  %v1056 = vld [vmem:[%s1046 + $0x48] sm:$0xff]
  %v1057 = vld [vmem:[%s1046 + $0x50] sm:$0xff]
  %v1058 = vld [vmem:[%s1046 + $0x58] sm:$0xff]
  %v1059 = vld [vmem:[%s1046 + $0x60] sm:$0xff]
  %v1060 = vld [vmem:[%s1046 + $0x68] sm:$0xff]
  %v1061 = vld [vmem:[%s1046 + $0x70] sm:$0xff]
  %v1062 = vld [vmem:[%s1046 + $0x78] sm:$0xff]
  %1063 = vmatpush.msra.mxu0 %v1062
  %1064 = vmatpush.msra.mxu0 %v1061
  %1065 = vmatpush.msra.mxu0 %v1060
  %1066 = vmatpush.msra.mxu0 %v1059
  %1067 = vmatpush.msra.mxu0 %v1058
  %1068 = vmatpush.msra.mxu0 %v1057
  %1069 = vmatpush.msra.mxu0 %v1056
  %1070 = vmatpush.msra.mxu0 %v1055
  %1071 = vmatpush.msra.mxu0 %v1054
  %1072 = vmatpush.msra.mxu0 %v1053
  %1073 = vmatpush.msra.mxu0 %v1052
  %1074 = vmatpush.msra.mxu0 %v1051
  %1075 = vmatpush.msra.mxu0 %v1050
  %1076 = vmatpush.msra.mxu0 %v1049
  %1077 = vmatpush.msra.mxu0 %v1048
  %1078 = vmatpush.msra.mxu0 %v1047
  %1079 = vmatmul.f32.gmra.mxu0 %v795
  %v1080 = vpop.f32.mrf.mxu0
  %v1081 = vadd.f32 0.0, %v1080
  %1082 = vmatmul.f32.gmra.mxu0 %v796
  %v1083 = vpop.f32.mrf.mxu0
  %v1084 = vadd.f32 0.0, %v1083
  %1085 = vmatmul.f32.gmra.mxu0 %v797
  %v1086 = vpop.f32.mrf.mxu0
  %v1087 = vadd.f32 0.0, %v1086
  %1088 = vmatmul.f32.gmra.mxu0 %v798
  %v1089 = vpop.f32.mrf.mxu0
  %v1090 = vadd.f32 0.0, %v1089
  %1091 = vdwg.mxu0
  %v1092 = vadd.f32 %v1042, %v1081
  %v1093 = vadd.f32 %v1043, %v1084
  %v1094 = vadd.f32 %v1044, %v1087
  %v1095 = vadd.f32 %v1045, %v1090
  %1096 = vrot.lane.b32.xlu0 %v795, 120
  %v1097 = vpop.permute.xlu0 %1096
  %1098 = vrot.lane.b32.xlu0 %v796, 120
  %v1099 = vpop.permute.xlu0 %1098
  %1100 = vrot.lane.b32.xlu0 %v797, 120
  %v1101 = vpop.permute.xlu0 %1100
  %1102 = vrot.lane.b32.xlu0 %v798, 120
  %v1103 = vpop.permute.xlu0 %1102
  %s1108 = scalar_lea.vmem %s2, 640
  %v1109 = vld [vmem:[%s1108] sm:$0xff]
  %v1110 = vld [vmem:[%s1108 + $0x8] sm:$0xff]
  %v1111 = vld [vmem:[%s1108 + $0x10] sm:$0xff]
  %v1112 = vld [vmem:[%s1108 + $0x18] sm:$0xff]
  %v1113 = vld [vmem:[%s1108 + $0x20] sm:$0xff]
  %v1114 = vld [vmem:[%s1108 + $0x28] sm:$0xff]
  %v1115 = vld [vmem:[%s1108 + $0x30] sm:$0xff]
  %v1116 = vld [vmem:[%s1108 + $0x38] sm:$0xff]
  %v1117 = vld [vmem:[%s1108 + $0x40] sm:$0xff]
  %v1118 = vld [vmem:[%s1108 + $0x48] sm:$0xff]
  %v1119 = vld [vmem:[%s1108 + $0x50] sm:$0xff]
  %v1120 = vld [vmem:[%s1108 + $0x58] sm:$0xff]
  %v1121 = vld [vmem:[%s1108 + $0x60] sm:$0xff]
  %v1122 = vld [vmem:[%s1108 + $0x68] sm:$0xff]
  %v1123 = vld [vmem:[%s1108 + $0x70] sm:$0xff]
  %v1124 = vld [vmem:[%s1108 + $0x78] sm:$0xff]
  %1125 = vmatpush.msra.mxu0 %v1124
  %1126 = vmatpush.msra.mxu0 %v1123
  %1127 = vmatpush.msra.mxu0 %v1122
  %1128 = vmatpush.msra.mxu0 %v1121
  %1129 = vmatpush.msra.mxu0 %v1120
  %1130 = vmatpush.msra.mxu0 %v1119
  %1131 = vmatpush.msra.mxu0 %v1118
  %1132 = vmatpush.msra.mxu0 %v1117
  %1133 = vmatpush.msra.mxu0 %v1116
  %1134 = vmatpush.msra.mxu0 %v1115
  %1135 = vmatpush.msra.mxu0 %v1114
  %1136 = vmatpush.msra.mxu0 %v1113
  %1137 = vmatpush.msra.mxu0 %v1112
  %1138 = vmatpush.msra.mxu0 %v1111
  %1139 = vmatpush.msra.mxu0 %v1110
  %1140 = vmatpush.msra.mxu0 %v1109
  %1141 = vmatmul.f32.gmra.mxu0 %v1097
  %v1142 = vpop.f32.mrf.mxu0
  %v1143 = vadd.f32 0.0, %v1142
  %1144 = vmatmul.f32.gmra.mxu0 %v1099
  %v1145 = vpop.f32.mrf.mxu0
  %v1146 = vadd.f32 0.0, %v1145
  %1147 = vmatmul.f32.gmra.mxu0 %v1101
  %v1148 = vpop.f32.mrf.mxu0
  %v1149 = vadd.f32 0.0, %v1148
  %1150 = vmatmul.f32.gmra.mxu0 %v1103
  %v1151 = vpop.f32.mrf.mxu0
  %v1152 = vadd.f32 0.0, %v1151
  %1153 = vdwg.mxu0
  %v1154 = vadd.f32 %v1092, %v1143
  %v1155 = vadd.f32 %v1093, %v1146
  %v1156 = vadd.f32 %v1094, %v1149
  %v1157 = vadd.f32 %v1095, %v1152
  %v1158 = vrot.slane %v795, 1
  %v1159 = vrot.slane %v796, 1
  %v1160 = vsel %vm465, %v1158, %v1159
  %v1161 = vrot.slane %v797, 1
  %v1162 = vrot.slane %v798, 1
  %v1163 = vsel %vm465, %v1161, %v1162
  %v1170 = vsel %vm465, %v1159, %v1158
  %v1171 = vsel %vm465, %v1162, %v1161
  %1174 = vrot.lane.b32.xlu0 %v1160, 8
  %v1175 = vpop.permute.xlu0 %1174
  %1176 = vrot.lane.b32.xlu0 %v1170, 8
  %v1177 = vpop.permute.xlu0 %1176
  %1178 = vrot.lane.b32.xlu0 %v1163, 8
  %v1179 = vpop.permute.xlu0 %1178
  %1180 = vrot.lane.b32.xlu0 %v1171, 8
  %v1181 = vpop.permute.xlu0 %1180
  %s1186 = scalar_lea.vmem %s2, 768
  %v1187 = vld [vmem:[%s1186] sm:$0xff]
  %v1188 = vld [vmem:[%s1186 + $0x8] sm:$0xff]
  %v1189 = vld [vmem:[%s1186 + $0x10] sm:$0xff]
  %v1190 = vld [vmem:[%s1186 + $0x18] sm:$0xff]
  %v1191 = vld [vmem:[%s1186 + $0x20] sm:$0xff]
  %v1192 = vld [vmem:[%s1186 + $0x28] sm:$0xff]
  %v1193 = vld [vmem:[%s1186 + $0x30] sm:$0xff]
  %v1194 = vld [vmem:[%s1186 + $0x38] sm:$0xff]
  %v1195 = vld [vmem:[%s1186 + $0x40] sm:$0xff]
  %v1196 = vld [vmem:[%s1186 + $0x48] sm:$0xff]
  %v1197 = vld [vmem:[%s1186 + $0x50] sm:$0xff]
  %v1198 = vld [vmem:[%s1186 + $0x58] sm:$0xff]
  %v1199 = vld [vmem:[%s1186 + $0x60] sm:$0xff]
  %v1200 = vld [vmem:[%s1186 + $0x68] sm:$0xff]
  %v1201 = vld [vmem:[%s1186 + $0x70] sm:$0xff]
  %v1202 = vld [vmem:[%s1186 + $0x78] sm:$0xff]
  %1203 = vmatpush.msra.mxu0 %v1202
  %1204 = vmatpush.msra.mxu0 %v1201
  %1205 = vmatpush.msra.mxu0 %v1200
  %1206 = vmatpush.msra.mxu0 %v1199
  %1207 = vmatpush.msra.mxu0 %v1198
  %1208 = vmatpush.msra.mxu0 %v1197
  %1209 = vmatpush.msra.mxu0 %v1196
  %1210 = vmatpush.msra.mxu0 %v1195
  %1211 = vmatpush.msra.mxu0 %v1194
  %1212 = vmatpush.msra.mxu0 %v1193
  %1213 = vmatpush.msra.mxu0 %v1192
  %1214 = vmatpush.msra.mxu0 %v1191
  %1215 = vmatpush.msra.mxu0 %v1190
  %1216 = vmatpush.msra.mxu0 %v1189
  %1217 = vmatpush.msra.mxu0 %v1188
  %1218 = vmatpush.msra.mxu0 %v1187
  %1219 = vmatmul.f32.gmra.mxu0 %v1175
  %v1220 = vpop.f32.mrf.mxu0
  %v1221 = vadd.f32 0.0, %v1220
  %1222 = vmatmul.f32.gmra.mxu0 %v1177
  %v1223 = vpop.f32.mrf.mxu0
  %v1224 = vadd.f32 0.0, %v1223
  %1225 = vmatmul.f32.gmra.mxu0 %v1179
  %v1226 = vpop.f32.mrf.mxu0
  %v1227 = vadd.f32 0.0, %v1226
  %1228 = vmatmul.f32.gmra.mxu0 %v1181
  %v1229 = vpop.f32.mrf.mxu0
  %v1230 = vadd.f32 0.0, %v1229
  %1231 = vdwg.mxu0
  %v1232 = vadd.f32 %v1154, %v1221
  %v1233 = vadd.f32 %v1155, %v1224
  %v1234 = vadd.f32 %v1156, %v1227
  %v1235 = vadd.f32 %v1157, %v1230
  %s1236 = scalar_lea.vmem %s2, 896
  %v1237 = vld [vmem:[%s1236] sm:$0xff]
  %v1238 = vld [vmem:[%s1236 + $0x8] sm:$0xff]
  %v1239 = vld [vmem:[%s1236 + $0x10] sm:$0xff]
  %v1240 = vld [vmem:[%s1236 + $0x18] sm:$0xff]
  %v1241 = vld [vmem:[%s1236 + $0x20] sm:$0xff]
  %v1242 = vld [vmem:[%s1236 + $0x28] sm:$0xff]
  %v1243 = vld [vmem:[%s1236 + $0x30] sm:$0xff]
  %v1244 = vld [vmem:[%s1236 + $0x38] sm:$0xff]
  %v1245 = vld [vmem:[%s1236 + $0x40] sm:$0xff]
  %v1246 = vld [vmem:[%s1236 + $0x48] sm:$0xff]
  %v1247 = vld [vmem:[%s1236 + $0x50] sm:$0xff]
  %v1248 = vld [vmem:[%s1236 + $0x58] sm:$0xff]
  %v1249 = vld [vmem:[%s1236 + $0x60] sm:$0xff]
  %v1250 = vld [vmem:[%s1236 + $0x68] sm:$0xff]
  %v1251 = vld [vmem:[%s1236 + $0x70] sm:$0xff]
  %v1252 = vld [vmem:[%s1236 + $0x78] sm:$0xff]
  %1253 = vmatpush.msra.mxu0 %v1252
  %1254 = vmatpush.msra.mxu0 %v1251
  %1255 = vmatpush.msra.mxu0 %v1250
  %1256 = vmatpush.msra.mxu0 %v1249
  %1257 = vmatpush.msra.mxu0 %v1248
  %1258 = vmatpush.msra.mxu0 %v1247
  %1259 = vmatpush.msra.mxu0 %v1246
  %1260 = vmatpush.msra.mxu0 %v1245
  %1261 = vmatpush.msra.mxu0 %v1244
  %1262 = vmatpush.msra.mxu0 %v1243
  %1263 = vmatpush.msra.mxu0 %v1242
  %1264 = vmatpush.msra.mxu0 %v1241
  %1265 = vmatpush.msra.mxu0 %v1240
  %1266 = vmatpush.msra.mxu0 %v1239
  %1267 = vmatpush.msra.mxu0 %v1238
  %1268 = vmatpush.msra.mxu0 %v1237
  %1269 = vmatmul.f32.gmra.mxu0 %v1160
  %v1270 = vpop.f32.mrf.mxu0
  %v1271 = vadd.f32 0.0, %v1270
  %1272 = vmatmul.f32.gmra.mxu0 %v1170
  %v1273 = vpop.f32.mrf.mxu0
  %v1274 = vadd.f32 0.0, %v1273
  %1275 = vmatmul.f32.gmra.mxu0 %v1163
  %v1276 = vpop.f32.mrf.mxu0
  %v1277 = vadd.f32 0.0, %v1276
  %1278 = vmatmul.f32.gmra.mxu0 %v1171
  %v1279 = vpop.f32.mrf.mxu0
  %v1280 = vadd.f32 0.0, %v1279
  %1281 = vdwg.mxu0
  %v1282 = vadd.f32 %v1232, %v1271
  %v1283 = vadd.f32 %v1233, %v1274
  %v1284 = vadd.f32 %v1234, %v1277
  %v1285 = vadd.f32 %v1235, %v1280
  %1286 = vrot.lane.b32.xlu0 %v1160, 120
  %v1287 = vpop.permute.xlu0 %1286
  %1288 = vrot.lane.b32.xlu0 %v1170, 120
  %v1289 = vpop.permute.xlu0 %1288
  %1290 = vrot.lane.b32.xlu0 %v1163, 120
  %v1291 = vpop.permute.xlu0 %1290
  %1292 = vrot.lane.b32.xlu0 %v1171, 120
  %v1293 = vpop.permute.xlu0 %1292
  %s1298 = scalar_lea.vmem %s2, 1024
  %v1299 = vld [vmem:[%s1298] sm:$0xff]
  %v1300 = vld [vmem:[%s1298 + $0x8] sm:$0xff]
  %v1301 = vld [vmem:[%s1298 + $0x10] sm:$0xff]
  %v1302 = vld [vmem:[%s1298 + $0x18] sm:$0xff]
  %v1303 = vld [vmem:[%s1298 + $0x20] sm:$0xff]
  %v1304 = vld [vmem:[%s1298 + $0x28] sm:$0xff]
  %v1305 = vld [vmem:[%s1298 + $0x30] sm:$0xff]
  %v1306 = vld [vmem:[%s1298 + $0x38] sm:$0xff]
  %v1307 = vld [vmem:[%s1298 + $0x40] sm:$0xff]
  %v1308 = vld [vmem:[%s1298 + $0x48] sm:$0xff]
  %v1309 = vld [vmem:[%s1298 + $0x50] sm:$0xff]
  %v1310 = vld [vmem:[%s1298 + $0x58] sm:$0xff]
  %v1311 = vld [vmem:[%s1298 + $0x60] sm:$0xff]
  %v1312 = vld [vmem:[%s1298 + $0x68] sm:$0xff]
  %v1313 = vld [vmem:[%s1298 + $0x70] sm:$0xff]
  %v1314 = vld [vmem:[%s1298 + $0x78] sm:$0xff]
  %1315 = vmatpush.msra.mxu0 %v1314
  %1316 = vmatpush.msra.mxu0 %v1313
  %1317 = vmatpush.msra.mxu0 %v1312
  %1318 = vmatpush.msra.mxu0 %v1311
  %1319 = vmatpush.msra.mxu0 %v1310
  %1320 = vmatpush.msra.mxu0 %v1309
  %1321 = vmatpush.msra.mxu0 %v1308
  %1322 = vmatpush.msra.mxu0 %v1307
  %1323 = vmatpush.msra.mxu0 %v1306
  %1324 = vmatpush.msra.mxu0 %v1305
  %1325 = vmatpush.msra.mxu0 %v1304
  %1326 = vmatpush.msra.mxu0 %v1303
  %1327 = vmatpush.msra.mxu0 %v1302
  %1328 = vmatpush.msra.mxu0 %v1301
  %1329 = vmatpush.msra.mxu0 %v1300
  %1330 = vmatpush.msra.mxu0 %v1299
  %1331 = vmatmul.f32.gmra.mxu0 %v1287
  %v1332 = vpop.f32.mrf.mxu0
  %v1333 = vadd.f32 0.0, %v1332
  %1334 = vmatmul.f32.gmra.mxu0 %v1289
  %v1335 = vpop.f32.mrf.mxu0
  %v1336 = vadd.f32 0.0, %v1335
  %1337 = vmatmul.f32.gmra.mxu0 %v1291
  %v1338 = vpop.f32.mrf.mxu0
  %v1339 = vadd.f32 0.0, %v1338
  %1340 = vmatmul.f32.gmra.mxu0 %v1293
  %v1341 = vpop.f32.mrf.mxu0
  %v1342 = vadd.f32 0.0, %v1341
  %1343 = vdwg.mxu0
  %v1344 = vadd.f32 %v1282, %v1333
  %v1345 = vadd.f32 %v1283, %v1336
  %v1346 = vadd.f32 %v1284, %v1339
  %v1347 = vadd.f32 %v1285, %v1342
  %v1348 = vld [vmem:[%s4 + $0x2] sm:$0x1]
  %v1349 = vld [vmem:[%s4 + $0x3] sm:$0x1]
  %v1350 = vadd.f32 %v1344, %v1345
  %v1351 = vadd.f32 %v1350, %v1346
  %v1352 = vadd.f32 %v1351, %v1347
  %v1353 = vrot.slane %v1352, 4
  %v1354 = vadd.f32 %v1352, %v1353
  %v1355 = vrot.slane %v1354, 2
  %v1356 = vadd.f32 %v1354, %v1355
  %v1357 = vrot.slane %v1356, 1
  %v1358 = vadd.f32 %v1356, %v1357
  %1360 = vrot.lane.b32.xlu0 %v1358, 64
  %v1361 = vpop.permute.xlu0 %1360
  %v1363 = vadd.f32 %v1358, %v1361
  %1365 = vrot.lane.b32.xlu0 %v1363, 96
  %v1366 = vpop.permute.xlu0 %1365
  %v1368 = vadd.f32 %v1363, %v1366
  %1370 = vrot.lane.b32.xlu0 %v1368, 112
  %v1371 = vpop.permute.xlu0 %1370
  %v1373 = vadd.f32 %v1368, %v1371
  %1375 = vrot.lane.b32.xlu0 %v1373, 120
  %v1376 = vpop.permute.xlu0 %1375
  %v1378 = vadd.f32 %v1373, %v1376
  %v1379 = vmul.f32 %v1378, 0.001953125
  %v1380 = vperm.slane %v1379, 0
  %v1381 = vsub.f32 %v1344, %v1380
  %v1382 = vsub.f32 %v1345, %v1380
  %v1383 = vsub.f32 %v1346, %v1380
  %v1384 = vsub.f32 %v1347, %v1380
  %v1385 = vmul.f32 %v1381, %v1381
  %v1386 = vmul.f32 %v1382, %v1382
  %v1387 = vmul.f32 %v1383, %v1383
  %v1388 = vmul.f32 %v1384, %v1384
  %v1389 = vadd.f32 %v1385, %v1386
  %v1390 = vadd.f32 %v1389, %v1387
  %v1391 = vadd.f32 %v1390, %v1388
  %v1392 = vrot.slane %v1391, 4
  %v1393 = vadd.f32 %v1391, %v1392
  %v1394 = vrot.slane %v1393, 2
  %v1395 = vadd.f32 %v1393, %v1394
  %v1396 = vrot.slane %v1395, 1
  %v1397 = vadd.f32 %v1395, %v1396
  %1399 = vrot.lane.b32.xlu0 %v1397, 64
  %v1400 = vpop.permute.xlu0 %1399
  %v1402 = vadd.f32 %v1397, %v1400
  %1404 = vrot.lane.b32.xlu0 %v1402, 96
  %v1405 = vpop.permute.xlu0 %1404
  %v1407 = vadd.f32 %v1402, %v1405
  %1409 = vrot.lane.b32.xlu0 %v1407, 112
  %v1410 = vpop.permute.xlu0 %1409
  %v1412 = vadd.f32 %v1407, %v1410
  %1414 = vrot.lane.b32.xlu0 %v1412, 120
  %v1415 = vpop.permute.xlu0 %1414
  %v1417 = vadd.f32 %v1412, %v1415
  %v1418 = vmul.f32 %v1417, 0.001953125
  %v1419 = vadd.f32 %v1418, 1e-05
  %v1420 = vrsqrt.pop %v1419
  %v1421 = vmul.f32 %v1420, %v1419
  %v1422 = vmul.f32 %v1421, %v1420
  %v1423 = vmul.f32 0.5, %v1422
  %v1424 = vsub.f32 1.5, %v1423
  %v1425 = vmul.f32 %v1420, %v1424
  %vm1426 = vweird.f32 %v1419
  %vm1427 = vweird.f32 %v1420
  %vm1428 = vmor %vm1426, %vm1427
  %v1429 = vsel %vm1428, %v1420, %v1425
  %v1430 = vmul.f32 %v1348, %v1429
  %v1431 = vperm.slane %v1430, 0
  %v1432 = vmul.f32 %v1381, %v1431
  %v1433 = vmul.f32 %v1382, %v1431
  %v1434 = vmul.f32 %v1383, %v1431
  %v1435 = vmul.f32 %v1384, %v1431
  %v1436 = vperm.slane %v1349, 0
  %v1437 = vadd.f32 %v1432, %v1436
  %v1438 = vadd.f32 %v1433, %v1436
  %v1439 = vadd.f32 %v1434, %v1436
  %v1440 = vadd.f32 %v1435, %v1436
  %vm1441 = vcmp.ge.f32.partialorder %v1437, 0.0
  %vm1442 = vcmp.ge.f32.partialorder %v1438, 0.0
  %vm1443 = vcmp.ge.f32.partialorder %v1439, 0.0
  %vm1444 = vcmp.ge.f32.partialorder %v1440, 0.0
  %v1445 = vmul.f32 %v1437, 0.01
  %v1446 = vmul.f32 %v1438, 0.01
  %v1447 = vmul.f32 %v1439, 0.01
  %v1448 = vmul.f32 %v1440, 0.01
  %v1449 = vsel %vm1441, %v1437, %v1445
  %v1450 = vsel %vm1442, %v1438, %v1446
  %v1451 = vsel %vm1443, %v1439, %v1447
  %v1452 = vsel %vm1444, %v1440, %v1448
  %v1453 = vld [vmem:[%s3] sm:$0xff]
  %v1454 = vld [vmem:[%s3 + $0x8] sm:$0xff]
  %v1455 = vld [vmem:[%s3 + $0x10] sm:$0xff]
  %v1456 = vld [vmem:[%s3 + $0x18] sm:$0xff]
  %v1457 = vld [vmem:[%s3 + $0x20] sm:$0xff]
  %v1458 = vld [vmem:[%s3 + $0x28] sm:$0xff]
  %v1459 = vld [vmem:[%s3 + $0x30] sm:$0xff]
  %v1460 = vld [vmem:[%s3 + $0x38] sm:$0xff]
  %v1461 = vld [vmem:[%s3 + $0x40] sm:$0xff]
  %v1462 = vld [vmem:[%s3 + $0x48] sm:$0xff]
  %v1463 = vld [vmem:[%s3 + $0x50] sm:$0xff]
  %v1464 = vld [vmem:[%s3 + $0x58] sm:$0xff]
  %v1465 = vld [vmem:[%s3 + $0x60] sm:$0xff]
  %v1466 = vld [vmem:[%s3 + $0x68] sm:$0xff]
  %v1467 = vld [vmem:[%s3 + $0x70] sm:$0xff]
  %v1468 = vld [vmem:[%s3 + $0x78] sm:$0xff]
  %1469 = vmatpush.msra.mxu0 %v1468
  %1470 = vmatpush.msra.mxu0 %v1467
  %1471 = vmatpush.msra.mxu0 %v1466
  %1472 = vmatpush.msra.mxu0 %v1465
  %1473 = vmatpush.msra.mxu0 %v1464
  %1474 = vmatpush.msra.mxu0 %v1463
  %1475 = vmatpush.msra.mxu0 %v1462
  %1476 = vmatpush.msra.mxu0 %v1461
  %1477 = vmatpush.msra.mxu0 %v1460
  %1478 = vmatpush.msra.mxu0 %v1459
  %1479 = vmatpush.msra.mxu0 %v1458
  %1480 = vmatpush.msra.mxu0 %v1457
  %1481 = vmatpush.msra.mxu0 %v1456
  %1482 = vmatpush.msra.mxu0 %v1455
  %1483 = vmatpush.msra.mxu0 %v1454
  %1484 = vmatpush.msra.mxu0 %v1453
  %1485 = vmatmul.f32.gmra.mxu0 %v1449
  %v1486 = vpop.f32.mrf.mxu0
  %v1487 = vadd.f32 0.0, %v1486
  %1488 = vmatmul.f32.gmra.mxu0 %v1450
  %v1489 = vpop.f32.mrf.mxu0
  %v1490 = vadd.f32 0.0, %v1489
  %1491 = vmatmul.f32.gmra.mxu0 %v1451
  %v1492 = vpop.f32.mrf.mxu0
  %v1493 = vadd.f32 0.0, %v1492
  %1494 = vmatmul.f32.gmra.mxu0 %v1452
  %v1495 = vpop.f32.mrf.mxu0
  %v1496 = vadd.f32 0.0, %v1495
  %1497 = vdwg.mxu0
  %v1498 = vld [vmem:[%s4 + $0x4] sm:$0x1]
  %v1499 = vld [vmem:[%s4 + $0x5] sm:$0x1]
  %v1500 = vadd.f32 %v1487, %v1490
  %v1501 = vadd.f32 %v1500, %v1493
  %v1502 = vadd.f32 %v1501, %v1496
  %v1503 = vrot.slane %v1502, 4
  %v1504 = vadd.f32 %v1502, %v1503
  %v1505 = vrot.slane %v1504, 2
  %v1506 = vadd.f32 %v1504, %v1505
  %v1507 = vrot.slane %v1506, 1
  %v1508 = vadd.f32 %v1506, %v1507
  %1510 = vrot.lane.b32.xlu0 %v1508, 64
  %v1511 = vpop.permute.xlu0 %1510
  %v1513 = vadd.f32 %v1508, %v1511
  %1515 = vrot.lane.b32.xlu0 %v1513, 96
  %v1516 = vpop.permute.xlu0 %1515
  %v1518 = vadd.f32 %v1513, %v1516
  %1520 = vrot.lane.b32.xlu0 %v1518, 112
  %v1521 = vpop.permute.xlu0 %1520
  %v1523 = vadd.f32 %v1518, %v1521
  %1525 = vrot.lane.b32.xlu0 %v1523, 120
  %v1526 = vpop.permute.xlu0 %1525
  %v1528 = vadd.f32 %v1523, %v1526
  %v1529 = vmul.f32 %v1528, 0.001953125
  %v1530 = vperm.slane %v1529, 0
  %v1531 = vsub.f32 %v1487, %v1530
  %v1532 = vsub.f32 %v1490, %v1530
  %v1533 = vsub.f32 %v1493, %v1530
  %v1534 = vsub.f32 %v1496, %v1530
  %v1535 = vmul.f32 %v1531, %v1531
  %v1536 = vmul.f32 %v1532, %v1532
  %v1537 = vmul.f32 %v1533, %v1533
  %v1538 = vmul.f32 %v1534, %v1534
  %v1539 = vadd.f32 %v1535, %v1536
  %v1540 = vadd.f32 %v1539, %v1537
  %v1541 = vadd.f32 %v1540, %v1538
  %v1542 = vrot.slane %v1541, 4
  %v1543 = vadd.f32 %v1541, %v1542
  %v1544 = vrot.slane %v1543, 2
  %v1545 = vadd.f32 %v1543, %v1544
  %v1546 = vrot.slane %v1545, 1
  %v1547 = vadd.f32 %v1545, %v1546
  %1549 = vrot.lane.b32.xlu0 %v1547, 64
  %v1550 = vpop.permute.xlu0 %1549
  %v1552 = vadd.f32 %v1547, %v1550
  %1554 = vrot.lane.b32.xlu0 %v1552, 96
  %v1555 = vpop.permute.xlu0 %1554
  %v1557 = vadd.f32 %v1552, %v1555
  %1559 = vrot.lane.b32.xlu0 %v1557, 112
  %v1560 = vpop.permute.xlu0 %1559
  %v1562 = vadd.f32 %v1557, %v1560
  %1564 = vrot.lane.b32.xlu0 %v1562, 120
  %v1565 = vpop.permute.xlu0 %1564
  %v1567 = vadd.f32 %v1562, %v1565
  %v1568 = vmul.f32 %v1567, 0.001953125
  %v1569 = vadd.f32 %v1568, 1e-05
  %v1570 = vrsqrt.pop %v1569
  %v1571 = vmul.f32 %v1570, %v1569
  %v1572 = vmul.f32 %v1571, %v1570
  %v1573 = vmul.f32 0.5, %v1572
  %v1574 = vsub.f32 1.5, %v1573
  %v1575 = vmul.f32 %v1570, %v1574
  %vm1576 = vweird.f32 %v1569
  %vm1577 = vweird.f32 %v1570
  %vm1578 = vmor %vm1576, %vm1577
  %v1579 = vsel %vm1578, %v1570, %v1575
  %v1580 = vmul.f32 %v1498, %v1579
  %v1581 = vperm.slane %v1580, 0
  %v1582 = vmul.f32 %v1531, %v1581
  %v1583 = vmul.f32 %v1532, %v1581
  %v1584 = vmul.f32 %v1533, %v1581
  %v1585 = vmul.f32 %v1534, %v1581
  %v1586 = vperm.slane %v1499, 0
  %v1587 = vadd.f32 %v1582, %v1586
  %v1588 = vadd.f32 %v1583, %v1586
  %v1589 = vadd.f32 %v1584, %v1586
  %v1590 = vadd.f32 %v1585, %v1586
  %vm1591 = vcmp.ge.f32.partialorder %v1587, 0.0
  %vm1592 = vcmp.ge.f32.partialorder %v1588, 0.0
  %vm1593 = vcmp.ge.f32.partialorder %v1589, 0.0
  %vm1594 = vcmp.ge.f32.partialorder %v1590, 0.0
  %v1595 = vmul.f32 %v1587, 0.01
  %v1596 = vmul.f32 %v1588, 0.01
  %v1597 = vmul.f32 %v1589, 0.01
  %v1598 = vmul.f32 %v1590, 0.01
  %v1599 = vsel %vm1591, %v1587, %v1595
  %v1600 = vsel %vm1592, %v1588, %v1596
  %v1601 = vsel %vm1593, %v1589, %v1597
  %v1602 = vsel %vm1594, %v1590, %v1598
  %1603 = vst [vmem:[%s5] sm:$0xff] %v1599
  %1604 = vst [vmem:[%s5 + $0x8] sm:$0xff] %v1600
  %1605 = vst [vmem:[%s5 + $0x10] sm:$0xff] %v1601
  %1606 = vst [vmem:[%s5 + $0x18] sm:$0xff] %v1602
  // Predicated region
  $region22: #{conv_block2d.1} parent=0 // pred_check
    _
  $region23: #{conv_block2d.1} parent=0 // pred_check_branch
    %1608 = sbr.rel (0) target = $region25
  $region24: #{conv_block2d.1} parent=0 // pred_region
    _
  $region25: #{conv_block2d.1} parent=0 // pred_fallthru
    _
  // Predicated region
  $region26: #{conv_block2d.1} parent=0 // pred_check
    _
  $region27: #{conv_block2d.1} parent=0 // pred_check_branch
    %1610 = sbr.rel (0) target = $region29
  $region28: #{conv_block2d.1} parent=0 // pred_region
    _
  $region29: #{conv_block2d.1} parent=0 // pred_fallthru
    _

</llo_original>
